<compile_context>
chip_gen: v5e
topology: v5e:2x2
jax: 0.10.0
libtpu: 0.0.40
codegen_flags: <defaults>
</compile_context>

<pallas_src>
import jax
import jax.numpy as jnp
from jax.experimental import pallas as pl
from jax.experimental.pallas import tpu as pltpu


def _round_up(x, m):
    return ((x + m - 1) // m) * m


def _vae_kernel(x_ref, eps_ref,
                we1, be1, we2, be2, we3, be3, we4, be4,
                wml, bml,
                w3, b3,
                wd1, bd1, wd2, bd2, wd3, bd3, wd4, bd4,
                out_ref):
    """Fused VAE forward for one batch tile.

    Weight refs are bf16 (MXU operands); accumulation, bias adds, activations,
    exp and sigmoid are f32; inter-layer activations are re-packed to bf16.
    The single output ref is the lane-packed slab [ mu | logvar | recon | 0 ].
    """
    cdt = we1.dtype  # MXU operand dtype (bf16)

    def matmul(h, w_ref, b_ref):
        # bf16 x bf16 -> f32 accumulation, f32 bias add.
        return (jnp.dot(h, w_ref[...], preferred_element_type=jnp.float32)
                + b_ref[...])

    def layer(h, w_ref, b_ref):
        # Linear + ReLU (f32), re-packed to bf16 for the next MXU op.
        return jnp.maximum(matmul(h, w_ref, b_ref), 0.0).astype(cdt)

    # --- encoder: F -> 32 -> 64 -> 128 -> h_dim (ReLU after each) ---
    h = layer(x_ref[...], we1, be1)
    h = layer(h, we2, be2)
    h = layer(h, we3, be3)
    h = layer(h, we4, be4)

    # --- bottleneck: fused fc1 || fc2 -> [bb, 2*z_dim] = mu || logvar (f32) ---
    ml = matmul(h, wml, bml)
    z_dim = ml.shape[-1] // 2
    mu = ml[:, :z_dim]
    logvar = ml[:, z_dim:]

    # reparameterize: z = mu + exp(0.5 * logvar) * eps  (eps supplied by host)
    z = mu + jnp.exp(0.5 * logvar) * eps_ref[...]

    # --- decoder: fc3 (no activation), then h_dim -> 128 -> 64 -> 32 -> F ---
    d = matmul(z.astype(cdt), w3, b3).astype(cdt)
    d = layer(d, wd1, bd1)
    d = layer(d, wd2, bd2)
    d = layer(d, wd3, bd3)
    logits = matmul(d, wd4, bd4)
    # sigmoid with the divide on the (otherwise idle) EUP slot.
    recon = pl.reciprocal(1.0 + jnp.exp(-logits), approx=True)

    # --- packed output slab: [ mu | logvar | recon | zero pad ] ---
    zc = 2 * z_dim
    f = recon.shape[-1]
    out_ref[:, :zc] = ml.astype(out_ref.dtype)
    out_ref[:, zc:zc + f] = recon.astype(out_ref.dtype)
    pad = out_ref.shape[-1] - zc - f
    if pad:  # keep padded lanes at 0 (not sigmoid(0)=0.5)
        out_ref[:, zc + f:] = jnp.zeros((recon.shape[0], pad), out_ref.dtype)


def _tile_defaults():
    """Generation-specific (batch_tile_rows, vmem_limit_bytes)."""
    try:
        kind = jax.devices()[0].device_kind.lower()
    except Exception:
        kind = ""
    if ("v5" in kind) or ("v6" in kind):
        # 128 MiB VMEM per core: large tile amortizes per-grid-step overhead.
        return 2048, 64 * 1024 * 1024
    # v7x (64 MiB per TensorCore) or unknown: conservative.
    return 1024, 40 * 1024 * 1024


def linear_vae_forward(x, eps, params, *, block_b=None,
                       compute_dtype=jnp.bfloat16, out_dtype=jnp.float32):
    """LinearVAE forward.  x: [B, F] f32, eps: [B, z_dim] f32 noise.

    Returns (recon [B, F], mu [B, z_dim], logvar [B, z_dim]) in `out_dtype`
    (set out_dtype=jnp.bfloat16 to halve output writeback if the consumer
    tolerates it).
    """
    B, F = x.shape
    h_dim, z_dim = params["wmu"].shape
    zc = 2 * z_dim
    slab_w = _round_up(zc + F, 128)  # packed, lane-dense output width

    cdt = compute_dtype
    wcast = lambda w: w.astype(cdt)

    # Fuse fc1 (mu) and fc2 (logvar) into one [h_dim, 2*z_dim] head.
    wml = jnp.concatenate([params["wmu"], params["wlv"]], axis=1).astype(cdt)
    bml = jnp.concatenate([params["bmu"], params["blv"]],
                          axis=1).astype(jnp.float32)

    x_c = x.astype(cdt)
    eps_f = eps.astype(jnp.float32)

    ins = [
        x_c, eps_f,
        wcast(params["we1"]), params["be1"],
        wcast(params["we2"]), params["be2"],
        wcast(params["we3"]), params["be3"],
        wcast(params["we4"]), params["be4"],
        wml, bml,
        wcast(params["w3"]), params["b3"],
        wcast(params["wd1"]), params["bd1"],
        wcast(params["wd2"]), params["bd2"],
        wcast(params["wd3"]), params["bd3"],
        wcast(params["wd4"]), params["bd4"],
    ]

    default_bb, vmem_limit = _tile_defaults()
    if block_b is None:
        block_b = default_bb

    if B <= 8:
        bb = B
    else:
        # Aim for >= 2 grid steps so the batch ("parallel") axis can shard
        # across TensorCores on multi-core chips; keep the tile 8-row aligned.
        bb = min(block_b, _round_up(pl.cdiv(B, 2), 8))
        bb = _round_up(bb, 8)
    grid = (pl.cdiv(B, bb),)

    # Advisory cost estimate (helps XLA schedule surrounding casts/slices).
    layer_dims = [(F, 32), (32, 64), (64, 128), (128, h_dim),
                  (h_dim, zc), (z_dim, h_dim),
                  (h_dim, 128), (128, 64), (64, 32), (32, F)]
    flops = 2 * B * sum(fi * fo for fi, fo in layer_dims)
    bytes_accessed = (sum(int(a.size) * a.dtype.itemsize for a in ins)
                      + B * slab_w * jnp.dtype(out_dtype).itemsize)
    cost = pl.CostEstimate(flops=flops,
                           transcendentals=B * (z_dim + 2 * F),
                           bytes_accessed=int(bytes_accessed))

    out_shape = jax.ShapeDtypeStruct((B, slab_w), out_dtype)
    x_spec = pl.BlockSpec((bb, F), lambda i: (i, 0))
    eps_spec = pl.BlockSpec((bb, z_dim), lambda i: (i, 0))
    out_spec = pl.BlockSpec((bb, slab_w), lambda i: (i, 0))

    def _w_spec(arr, mode):
        # Resident weight/bias block: index never changes across grid steps.
        if mode is None:
            return pl.BlockSpec(arr.shape, lambda i: (0, 0))
        return pl.BlockSpec(arr.shape, lambda i: (0, 0), pipeline_mode=mode)

    def build(weight_mode):
        return pl.pallas_call(
            _vae_kernel,
            out_shape=out_shape,
            grid_spec=pltpu.PrefetchScalarGridSpec(
                num_scalar_prefetch=0,
                grid=grid,
                in_specs=[x_spec, eps_spec] + [_w_spec(a, weight_mode)
                                               for a in ins[2:]],
                out_specs=out_spec,
            ),
            compiler_params=pltpu.CompilerParams(
                dimension_semantics=("parallel",),
                vmem_limit_bytes=vmem_limit,
            ),
            cost_estimate=cost,
        )

    try:
        # Weights never change across grid steps -> request single buffering
        # (saves ~1x the resident weight footprint of VMEM).
        slab = build(pl.Buffered(1))(*ins)
    except Exception:
        # Fallback if this jax/Mosaic build rejects single-buffered BlockSpecs.
        slab = build(None)(*ins)

    mu = slab[:, :z_dim]
    logvar = slab[:, z_dim:zc]
    recon = slab[:, zc:zc + F]
    return recon, mu, logvar


def init_params(key, input_features=2, h_dim=1024, z_dim=32):
    """PyTorch-style uniform(+-1/sqrt(fan_in)) init; weights stored [in, out]."""
    layer_dims = {
        "e1": (input_features, 32), "e2": (32, 64),
        "e3": (64, 128), "e4": (128, h_dim),
        "mu": (h_dim, z_dim), "lv": (h_dim, z_dim),
        "3": (z_dim, h_dim),
        "d1": (h_dim, 128), "d2": (128, 64),
        "d3": (64, 32), "d4": (32, input_features),
    }
    params = {}
    for name, (fi, fo) in layer_dims.items():
        key, kw, kb = jax.random.split(key, 3)
        bound = 1.0 / (fi ** 0.5)
        params["w" + name] = jax.random.uniform(
            kw, (fi, fo), jnp.float32, -bound, bound)
        # biases kept 2-D [1, out] (TPU-friendly), broadcast over the batch
        params["b" + name] = jax.random.uniform(
            kb, (1, fo), jnp.float32, -bound, bound)
    return params


def _reference_forward(x, eps, params, compute_dtype=jnp.bfloat16):
    """Pure-JAX reference with the same dtype policy as the kernel
    (bf16 MXU operands, f32 accumulation, bf16 inter-layer activations)."""
    cdt = compute_dtype

    def lin(h, w, b):
        return (jnp.dot(h.astype(cdt), w.astype(cdt),
                        preferred_element_type=jnp.float32) + b)

    relu = lambda v: jnp.maximum(v, 0.0)
    h = relu(lin(x, params["we1"], params["be1"]))
    h = relu(lin(h, params["we2"], params["be2"]))
    h = relu(lin(h, params["we3"], params["be3"]))
    h = relu(lin(h, params["we4"], params["be4"]))
    mu = lin(h, params["wmu"], params["bmu"])
    logvar = lin(h, params["wlv"], params["blv"])
    z = mu + jnp.exp(0.5 * logvar) * eps
    d = lin(z, params["w3"], params["b3"])
    d = relu(lin(d, params["wd1"], params["bd1"]))
    d = relu(lin(d, params["wd2"], params["bd2"]))
    d = relu(lin(d, params["wd3"], params["bd3"]))
    recon = 1.0 / (1.0 + jnp.exp(-lin(d, params["wd4"], params["bd4"])))
    return recon, mu, logvar


if __name__ == "__main__":
    key = jax.random.PRNGKey(0)
    input_features = 2   # module default
    h_dim = 256          # small test size (module default is 1024)
    z_dim = 32           # module default
    batch = 8

    key, k_x, k_eps, k_params = jax.random.split(key, 4)
    x = jax.random.uniform(k_x, (batch, input_features), jnp.float32)
    eps = jax.random.normal(k_eps, (batch, z_dim), jnp.float32)
    params = init_params(k_params, input_features, h_dim, z_dim)

    recon, mu, logvar = linear_vae_forward(x, eps, params)
    recon, mu, logvar = jax.block_until_ready((recon, mu, logvar))

    recon_ref, mu_ref, logvar_ref = _reference_forward(x, eps, params)

    assert recon.shape == (batch, input_features)
    assert mu.shape == (batch, z_dim) and logvar.shape == (batch, z_dim)
    assert jnp.allclose(recon, recon_ref, atol=2e-2, rtol=2e-2)
    assert jnp.allclose(mu, mu_ref, atol=2e-2, rtol=2e-2)
    assert jnp.allclose(logvar, logvar_ref, atol=2e-2, rtol=2e-2)

    print("KERNEL_OK")
</pallas_src>

<mosaic_0001>
module attributes {stable_mosaic.version = 11 : i64} {
  func.func @_vae_kernel(%arg0: i32, %arg1: memref<8x2xbf16, #tpu.memory_space<vmem>>, %arg2: memref<8x32xf32, #tpu.memory_space<vmem>>, %arg3: memref<2x32xbf16, #tpu.memory_space<vmem>>, %arg4: memref<1x32xf32, #tpu.memory_space<vmem>>, %arg5: memref<32x64xbf16, #tpu.memory_space<vmem>>, %arg6: memref<1x64xf32, #tpu.memory_space<vmem>>, %arg7: memref<64x128xbf16, #tpu.memory_space<vmem>>, %arg8: memref<1x128xf32, #tpu.memory_space<vmem>>, %arg9: memref<128x256xbf16, #tpu.memory_space<vmem>>, %arg10: memref<1x256xf32, #tpu.memory_space<vmem>>, %arg11: memref<256x64xbf16, #tpu.memory_space<vmem>>, %arg12: memref<1x64xf32, #tpu.memory_space<vmem>>, %arg13: memref<32x256xbf16, #tpu.memory_space<vmem>>, %arg14: memref<1x256xf32, #tpu.memory_space<vmem>>, %arg15: memref<256x128xbf16, #tpu.memory_space<vmem>>, %arg16: memref<1x128xf32, #tpu.memory_space<vmem>>, %arg17: memref<128x64xbf16, #tpu.memory_space<vmem>>, %arg18: memref<1x64xf32, #tpu.memory_space<vmem>>, %arg19: memref<64x32xbf16, #tpu.memory_space<vmem>>, %arg20: memref<1x32xf32, #tpu.memory_space<vmem>>, %arg21: memref<32x2xbf16, #tpu.memory_space<vmem>>, %arg22: memref<1x2xf32, #tpu.memory_space<vmem>>, %arg23: memref<8x128xf32, #tpu.memory_space<vmem>>) attributes {dimension_semantics = [#tpu.dimension_semantics<parallel>], iteration_bounds = array<i64: 1>, scalar_prefetch = 0 : i64, scratch_operands = 0 : i64, tpu.core_type = #tpu.core_type<tc>, window_params = [{transform_indices = @transform_0, window_bounds = array<i64: 8, 2>}, {transform_indices = @transform_1, window_bounds = array<i64: 8, 32>}, {pipeline_mode = #tpu.pipeline_mode<synchronous>, transform_indices = @transform_2, window_bounds = array<i64: 2, 32>}, {pipeline_mode = #tpu.pipeline_mode<synchronous>, transform_indices = @transform_3, window_bounds = array<i64: 1, 32>}, {pipeline_mode = #tpu.pipeline_mode<synchronous>, transform_indices = @transform_4, window_bounds = array<i64: 32, 64>}, {pipeline_mode = #tpu.pipeline_mode<synchronous>, transform_indices = @transform_5, window_bounds = array<i64: 1, 64>}, {pipeline_mode = #tpu.pipeline_mode<synchronous>, transform_indices = @transform_6, window_bounds = array<i64: 64, 128>}, {pipeline_mode = #tpu.pipeline_mode<synchronous>, transform_indices = @transform_7, window_bounds = array<i64: 1, 128>}, {pipeline_mode = #tpu.pipeline_mode<synchronous>, transform_indices = @transform_8, window_bounds = array<i64: 128, 256>}, {pipeline_mode = #tpu.pipeline_mode<synchronous>, transform_indices = @transform_9, window_bounds = array<i64: 1, 256>}, {pipeline_mode = #tpu.pipeline_mode<synchronous>, transform_indices = @transform_10, window_bounds = array<i64: 256, 64>}, {pipeline_mode = #tpu.pipeline_mode<synchronous>, transform_indices = @transform_11, window_bounds = array<i64: 1, 64>}, {pipeline_mode = #tpu.pipeline_mode<synchronous>, transform_indices = @transform_12, window_bounds = array<i64: 32, 256>}, {pipeline_mode = #tpu.pipeline_mode<synchronous>, transform_indices = @transform_13, window_bounds = array<i64: 1, 256>}, {pipeline_mode = #tpu.pipeline_mode<synchronous>, transform_indices = @transform_14, window_bounds = array<i64: 256, 128>}, {pipeline_mode = #tpu.pipeline_mode<synchronous>, transform_indices = @transform_15, window_bounds = array<i64: 1, 128>}, {pipeline_mode = #tpu.pipeline_mode<synchronous>, transform_indices = @transform_16, window_bounds = array<i64: 128, 64>}, {pipeline_mode = #tpu.pipeline_mode<synchronous>, transform_indices = @transform_17, window_bounds = array<i64: 1, 64>}, {pipeline_mode = #tpu.pipeline_mode<synchronous>, transform_indices = @transform_18, window_bounds = array<i64: 64, 32>}, {pipeline_mode = #tpu.pipeline_mode<synchronous>, transform_indices = @transform_19, window_bounds = array<i64: 1, 32>}, {pipeline_mode = #tpu.pipeline_mode<synchronous>, transform_indices = @transform_20, window_bounds = array<i64: 32, 2>}, {pipeline_mode = #tpu.pipeline_mode<synchronous>, transform_indices = @transform_21, window_bounds = array<i64: 1, 2>}, {transform_indices = @transform_22, window_bounds = array<i64: 8, 128>}]} {
    %c0 = arith.constant 0 : index
    %c0_0 = arith.constant 0 : index
    %0 = vector.load %arg1[%c0, %c0_0] : memref<8x2xbf16, #tpu.memory_space<vmem>>, vector<8x2xbf16>
    %c0_1 = arith.constant 0 : index
    %c0_2 = arith.constant 0 : index
    %1 = vector.load %arg3[%c0_1, %c0_2] : memref<2x32xbf16, #tpu.memory_space<vmem>>, vector<2x32xbf16>
    %cst = arith.constant dense<0.000000e+00> : vector<8x32xf32>
    %2 = tpu.matmul %0, %1, %cst {dimension_numbers = #tpu.dot_dimension_numbers<[1], [0], [0], [1], [0, 0, 1, 1], [], []>} : vector<8x2xbf16>, vector<2x32xbf16>, vector<8x32xf32> -> vector<8x32xf32>
    %c0_3 = arith.constant 0 : index
    %c0_4 = arith.constant 0 : index
    %3 = vector.load %arg4[%c0_3, %c0_4] : memref<1x32xf32, #tpu.memory_space<vmem>>, vector<1x32xf32>
    %4 = vector.broadcast %3 : vector<1x32xf32> to vector<8x32xf32>
    %5 = arith.addf %2, %4 : vector<8x32xf32>
    %cst_5 = arith.constant 0.000000e+00 : f32
    %6 = vector.broadcast %cst_5 : f32 to vector<8x32xf32>
    %7 = arith.maximumf %5, %6 : vector<8x32xf32>
    %8 = arith.truncf %7 : vector<8x32xf32> to vector<8x32xbf16>
    %c0_6 = arith.constant 0 : index
    %c0_7 = arith.constant 0 : index
    %9 = vector.load %arg5[%c0_6, %c0_7] : memref<32x64xbf16, #tpu.memory_space<vmem>>, vector<32x64xbf16>
    %cst_8 = arith.constant dense<0.000000e+00> : vector<8x64xf32>
    %10 = tpu.matmul %8, %9, %cst_8 {dimension_numbers = #tpu.dot_dimension_numbers<[1], [0], [0], [1], [0, 0, 1, 1], [], []>} : vector<8x32xbf16>, vector<32x64xbf16>, vector<8x64xf32> -> vector<8x64xf32>
    %c0_9 = arith.constant 0 : index
    %c0_10 = arith.constant 0 : index
    %11 = vector.load %arg6[%c0_9, %c0_10] : memref<1x64xf32, #tpu.memory_space<vmem>>, vector<1x64xf32>
    %12 = vector.broadcast %11 : vector<1x64xf32> to vector<8x64xf32>
    %13 = arith.addf %10, %12 : vector<8x64xf32>
    %cst_11 = arith.constant 0.000000e+00 : f32
    %14 = vector.broadcast %cst_11 : f32 to vector<8x64xf32>
    %15 = arith.maximumf %13, %14 : vector<8x64xf32>
    %16 = arith.truncf %15 : vector<8x64xf32> to vector<8x64xbf16>
    %c0_12 = arith.constant 0 : index
    %c0_13 = arith.constant 0 : index
    %17 = vector.load %arg7[%c0_12, %c0_13] : memref<64x128xbf16, #tpu.memory_space<vmem>>, vector<64x128xbf16>
    %cst_14 = arith.constant dense<0.000000e+00> : vector<8x128xf32>
    %18 = tpu.matmul %16, %17, %cst_14 {dimension_numbers = #tpu.dot_dimension_numbers<[1], [0], [0], [1], [0, 0, 1, 1], [], []>} : vector<8x64xbf16>, vector<64x128xbf16>, vector<8x128xf32> -> vector<8x128xf32>
    %c0_15 = arith.constant 0 : index
    %c0_16 = arith.constant 0 : index
    %19 = vector.load %arg8[%c0_15, %c0_16] : memref<1x128xf32, #tpu.memory_space<vmem>>, vector<1x128xf32>
    %20 = vector.broadcast %19 : vector<1x128xf32> to vector<8x128xf32>
    %21 = arith.addf %18, %20 : vector<8x128xf32>
    %cst_17 = arith.constant 0.000000e+00 : f32
    %22 = vector.broadcast %cst_17 : f32 to vector<8x128xf32>
    %23 = arith.maximumf %21, %22 : vector<8x128xf32>
    %24 = arith.truncf %23 : vector<8x128xf32> to vector<8x128xbf16>
    %c0_18 = arith.constant 0 : index
    %c0_19 = arith.constant 0 : index
    %25 = vector.load %arg9[%c0_18, %c0_19] : memref<128x256xbf16, #tpu.memory_space<vmem>>, vector<128x256xbf16>
    %cst_20 = arith.constant dense<0.000000e+00> : vector<8x256xf32>
    %26 = tpu.matmul %24, %25, %cst_20 {dimension_numbers = #tpu.dot_dimension_numbers<[1], [0], [0], [1], [0, 0, 1, 1], [], []>} : vector<8x128xbf16>, vector<128x256xbf16>, vector<8x256xf32> -> vector<8x256xf32>
    %c0_21 = arith.constant 0 : index
    %c0_22 = arith.constant 0 : index
    %27 = vector.load %arg10[%c0_21, %c0_22] : memref<1x256xf32, #tpu.memory_space<vmem>>, vector<1x256xf32>
    %28 = vector.broadcast %27 : vector<1x256xf32> to vector<8x256xf32>
    %29 = arith.addf %26, %28 : vector<8x256xf32>
    %cst_23 = arith.constant 0.000000e+00 : f32
    %30 = vector.broadcast %cst_23 : f32 to vector<8x256xf32>
    %31 = arith.maximumf %29, %30 : vector<8x256xf32>
    %32 = arith.truncf %31 : vector<8x256xf32> to vector<8x256xbf16>
    %c0_24 = arith.constant 0 : index
    %c0_25 = arith.constant 0 : index
    %33 = vector.load %arg11[%c0_24, %c0_25] : memref<256x64xbf16, #tpu.memory_space<vmem>>, vector<256x64xbf16>
    %cst_26 = arith.constant dense<0.000000e+00> : vector<8x64xf32>
    %34 = tpu.matmul %32, %33, %cst_26 {dimension_numbers = #tpu.dot_dimension_numbers<[1], [0], [0], [1], [0, 0, 1, 1], [], []>} : vector<8x256xbf16>, vector<256x64xbf16>, vector<8x64xf32> -> vector<8x64xf32>
    %c0_27 = arith.constant 0 : index
    %c0_28 = arith.constant 0 : index
    %35 = vector.load %arg12[%c0_27, %c0_28] : memref<1x64xf32, #tpu.memory_space<vmem>>, vector<1x64xf32>
    %36 = vector.broadcast %35 : vector<1x64xf32> to vector<8x64xf32>
    %37 = arith.addf %34, %36 : vector<8x64xf32>
    %38 = vector.extract_strided_slice %37 {offsets = [0, 0], sizes = [8, 32], strides = [1, 1]} : vector<8x64xf32> to vector<8x32xf32>
    %39 = vector.extract_strided_slice %37 {offsets = [0, 32], sizes = [8, 32], strides = [1, 1]} : vector<8x64xf32> to vector<8x32xf32>
    %cst_29 = arith.constant 5.000000e-01 : f32
    %40 = vector.broadcast %cst_29 : f32 to vector<8x32xf32>
    %41 = arith.mulf %40, %39 : vector<8x32xf32>
    %42 = math.exp %41 : vector<8x32xf32>
    %c0_30 = arith.constant 0 : index
    %c0_31 = arith.constant 0 : index
    %43 = vector.load %arg2[%c0_30, %c0_31] : memref<8x32xf32, #tpu.memory_space<vmem>>, vector<8x32xf32>
    %44 = arith.mulf %42, %43 : vector<8x32xf32>
    %45 = arith.addf %38, %44 : vector<8x32xf32>
    %46 = arith.truncf %45 : vector<8x32xf32> to vector<8x32xbf16>
    %c0_32 = arith.constant 0 : index
    %c0_33 = arith.constant 0 : index
    %47 = vector.load %arg13[%c0_32, %c0_33] : memref<32x256xbf16, #tpu.memory_space<vmem>>, vector<32x256xbf16>
    %cst_34 = arith.constant dense<0.000000e+00> : vector<8x256xf32>
    %48 = tpu.matmul %46, %47, %cst_34 {dimension_numbers = #tpu.dot_dimension_numbers<[1], [0], [0], [1], [0, 0, 1, 1], [], []>} : vector<8x32xbf16>, vector<32x256xbf16>, vector<8x256xf32> -> vector<8x256xf32>
    %c0_35 = arith.constant 0 : index
    %c0_36 = arith.constant 0 : index
    %49 = vector.load %arg14[%c0_35, %c0_36] : memref<1x256xf32, #tpu.memory_space<vmem>>, vector<1x256xf32>
    %50 = vector.broadcast %49 : vector<1x256xf32> to vector<8x256xf32>
    %51 = arith.addf %48, %50 : vector<8x256xf32>
    %52 = arith.truncf %51 : vector<8x256xf32> to vector<8x256xbf16>
    %c0_37 = arith.constant 0 : index
    %c0_38 = arith.constant 0 : index
    %53 = vector.load %arg15[%c0_37, %c0_38] : memref<256x128xbf16, #tpu.memory_space<vmem>>, vector<256x128xbf16>
    %cst_39 = arith.constant dense<0.000000e+00> : vector<8x128xf32>
    %54 = tpu.matmul %52, %53, %cst_39 {dimension_numbers = #tpu.dot_dimension_numbers<[1], [0], [0], [1], [0, 0, 1, 1], [], []>} : vector<8x256xbf16>, vector<256x128xbf16>, vector<8x128xf32> -> vector<8x128xf32>
    %c0_40 = arith.constant 0 : index
    %c0_41 = arith.constant 0 : index
    %55 = vector.load %arg16[%c0_40, %c0_41] : memref<1x128xf32, #tpu.memory_space<vmem>>, vector<1x128xf32>
    %56 = vector.broadcast %55 : vector<1x128xf32> to vector<8x128xf32>
    %57 = arith.addf %54, %56 : vector<8x128xf32>
    %cst_42 = arith.constant 0.000000e+00 : f32
    %58 = vector.broadcast %cst_42 : f32 to vector<8x128xf32>
    %59 = arith.maximumf %57, %58 : vector<8x128xf32>
    %60 = arith.truncf %59 : vector<8x128xf32> to vector<8x128xbf16>
    %c0_43 = arith.constant 0 : index
    %c0_44 = arith.constant 0 : index
    %61 = vector.load %arg17[%c0_43, %c0_44] : memref<128x64xbf16, #tpu.memory_space<vmem>>, vector<128x64xbf16>
    %cst_45 = arith.constant dense<0.000000e+00> : vector<8x64xf32>
    %62 = tpu.matmul %60, %61, %cst_45 {dimension_numbers = #tpu.dot_dimension_numbers<[1], [0], [0], [1], [0, 0, 1, 1], [], []>} : vector<8x128xbf16>, vector<128x64xbf16>, vector<8x64xf32> -> vector<8x64xf32>
    %c0_46 = arith.constant 0 : index
    %c0_47 = arith.constant 0 : index
    %63 = vector.load %arg18[%c0_46, %c0_47] : memref<1x64xf32, #tpu.memory_space<vmem>>, vector<1x64xf32>
    %64 = vector.broadcast %63 : vector<1x64xf32> to vector<8x64xf32>
    %65 = arith.addf %62, %64 : vector<8x64xf32>
    %cst_48 = arith.constant 0.000000e+00 : f32
    %66 = vector.broadcast %cst_48 : f32 to vector<8x64xf32>
    %67 = arith.maximumf %65, %66 : vector<8x64xf32>
    %68 = arith.truncf %67 : vector<8x64xf32> to vector<8x64xbf16>
    %c0_49 = arith.constant 0 : index
    %c0_50 = arith.constant 0 : index
    %69 = vector.load %arg19[%c0_49, %c0_50] : memref<64x32xbf16, #tpu.memory_space<vmem>>, vector<64x32xbf16>
    %cst_51 = arith.constant dense<0.000000e+00> : vector<8x32xf32>
    %70 = tpu.matmul %68, %69, %cst_51 {dimension_numbers = #tpu.dot_dimension_numbers<[1], [0], [0], [1], [0, 0, 1, 1], [], []>} : vector<8x64xbf16>, vector<64x32xbf16>, vector<8x32xf32> -> vector<8x32xf32>
    %c0_52 = arith.constant 0 : index
    %c0_53 = arith.constant 0 : index
    %71 = vector.load %arg20[%c0_52, %c0_53] : memref<1x32xf32, #tpu.memory_space<vmem>>, vector<1x32xf32>
    %72 = vector.broadcast %71 : vector<1x32xf32> to vector<8x32xf32>
    %73 = arith.addf %70, %72 : vector<8x32xf32>
    %cst_54 = arith.constant 0.000000e+00 : f32
    %74 = vector.broadcast %cst_54 : f32 to vector<8x32xf32>
    %75 = arith.maximumf %73, %74 : vector<8x32xf32>
    %76 = arith.truncf %75 : vector<8x32xf32> to vector<8x32xbf16>
    %c0_55 = arith.constant 0 : index
    %c0_56 = arith.constant 0 : index
    %77 = vector.load %arg21[%c0_55, %c0_56] : memref<32x2xbf16, #tpu.memory_space<vmem>>, vector<32x2xbf16>
    %cst_57 = arith.constant dense<0.000000e+00> : vector<8x2xf32>
    %78 = tpu.matmul %76, %77, %cst_57 {dimension_numbers = #tpu.dot_dimension_numbers<[1], [0], [0], [1], [0, 0, 1, 1], [], []>} : vector<8x32xbf16>, vector<32x2xbf16>, vector<8x2xf32> -> vector<8x2xf32>
    %c0_58 = arith.constant 0 : index
    %c0_59 = arith.constant 0 : index
    %79 = vector.load %arg22[%c0_58, %c0_59] : memref<1x2xf32, #tpu.memory_space<vmem>>, vector<1x2xf32>
    %80 = vector.broadcast %79 : vector<1x2xf32> to vector<8x2xf32>
    %81 = arith.addf %78, %80 : vector<8x2xf32>
    %cst_60 = arith.constant 0.000000e+00 : f32
    %82 = vector.broadcast %cst_60 : f32 to vector<8x2xf32>
    %83 = arith.subf %82, %81 : vector<8x2xf32>
    %84 = math.exp %83 : vector<8x2xf32>
    %cst_61 = arith.constant 1.000000e+00 : f32
    %85 = vector.broadcast %cst_61 : f32 to vector<8x2xf32>
    %86 = arith.addf %85, %84 : vector<8x2xf32>
    %87 = tpu.reciprocal %86 {approx = true} : vector<8x2xf32> -> vector<8x2xf32>
    %c0_62 = arith.constant 0 : index
    %c0_63 = arith.constant 0 : index
    %88 = vector.load %arg23[%c0_62, %c0_63] : memref<8x128xf32, #tpu.memory_space<vmem>>, vector<8x64xf32>
    tpu.vector_store %arg23[%c0_62, %c0_63], %37 {strides = array<i32>} : memref<8x128xf32, #tpu.memory_space<vmem>>, vector<8x64xf32>,
    %c0_64 = arith.constant 0 : index
    %c64 = arith.constant 64 : index
    %89 = vector.load %arg23[%c0_64, %c64] : memref<8x128xf32, #tpu.memory_space<vmem>>, vector<8x2xf32>
    tpu.vector_store %arg23[%c0_64, %c64], %87 {strides = array<i32>} : memref<8x128xf32, #tpu.memory_space<vmem>>, vector<8x2xf32>,
    %cst_65 = arith.constant 0.000000e+00 : f32
    %90 = vector.broadcast %cst_65 : f32 to vector<8x62xf32>
    %c0_66 = arith.constant 0 : index
    %c66 = arith.constant 66 : index
    %91 = vector.load %arg23[%c0_66, %c66] : memref<8x128xf32, #tpu.memory_space<vmem>>, vector<8x62xf32>
    tpu.vector_store %arg23[%c0_66, %c66], %90 {strides = array<i32>} : memref<8x128xf32, #tpu.memory_space<vmem>>, vector<8x62xf32>,
    return
  }
  func.func @transform_0(%arg0: i32) -> (i32, i32) {
    %c0_i32 = arith.constant 0 : i32
    %c0_i32_0 = arith.constant 0 : i32
    return %arg0, %c0_i32 : i32, i32
  }
  func.func @transform_1(%arg0: i32) -> (i32, i32) {
    %c0_i32 = arith.constant 0 : i32
    %c0_i32_0 = arith.constant 0 : i32
    return %arg0, %c0_i32 : i32, i32
  }
  func.func @transform_2(%arg0: i32) -> (i32, i32) {
    %c0_i32 = arith.constant 0 : i32
    %c0_i32_0 = arith.constant 0 : i32
    %c0_i32_1 = arith.constant 0 : i32
    return %c0_i32, %c0_i32_0 : i32, i32
  }
  func.func @transform_3(%arg0: i32) -> (i32, i32) {
    %c0_i32 = arith.constant 0 : i32
    %c0_i32_0 = arith.constant 0 : i32
    %c0_i32_1 = arith.constant 0 : i32
    return %c0_i32, %c0_i32_0 : i32, i32
  }
  func.func @transform_4(%arg0: i32) -> (i32, i32) {
    %c0_i32 = arith.constant 0 : i32
    %c0_i32_0 = arith.constant 0 : i32
    %c0_i32_1 = arith.constant 0 : i32
    return %c0_i32, %c0_i32_0 : i32, i32
  }
  func.func @transform_5(%arg0: i32) -> (i32, i32) {
    %c0_i32 = arith.constant 0 : i32
    %c0_i32_0 = arith.constant 0 : i32
    %c0_i32_1 = arith.constant 0 : i32
    return %c0_i32, %c0_i32_0 : i32, i32
  }
  func.func @transform_6(%arg0: i32) -> (i32, i32) {
    %c0_i32 = arith.constant 0 : i32
    %c0_i32_0 = arith.constant 0 : i32
    %c0_i32_1 = arith.constant 0 : i32
    return %c0_i32, %c0_i32_0 : i32, i32
  }
  func.func @transform_7(%arg0: i32) -> (i32, i32) {
    %c0_i32 = arith.constant 0 : i32
    %c0_i32_0 = arith.constant 0 : i32
    %c0_i32_1 = arith.constant 0 : i32
    return %c0_i32, %c0_i32_0 : i32, i32
  }
  func.func @transform_8(%arg0: i32) -> (i32, i32) {
    %c0_i32 = arith.constant 0 : i32
    %c0_i32_0 = arith.constant 0 : i32
    %c0_i32_1 = arith.constant 0 : i32
    return %c0_i32, %c0_i32_0 : i32, i32
  }
  func.func @transform_9(%arg0: i32) -> (i32, i32) {
    %c0_i32 = arith.constant 0 : i32
    %c0_i32_0 = arith.constant 0 : i32
    %c0_i32_1 = arith.constant 0 : i32
    return %c0_i32, %c0_i32_0 : i32, i32
  }
  func.func @transform_10(%arg0: i32) -> (i32, i32) {
    %c0_i32 = arith.constant 0 : i32
    %c0_i32_0 = arith.constant 0 : i32
    %c0_i32_1 = arith.constant 0 : i32
    return %c0_i32, %c0_i32_0 : i32, i32
  }
  func.func @transform_11(%arg0: i32) -> (i32, i32) {
    %c0_i32 = arith.constant 0 : i32
    %c0_i32_0 = arith.constant 0 : i32
    %c0_i32_1 = arith.constant 0 : i32
    return %c0_i32, %c0_i32_0 : i32, i32
  }
  func.func @transform_12(%arg0: i32) -> (i32, i32) {
    %c0_i32 = arith.constant 0 : i32
    %c0_i32_0 = arith.constant 0 : i32
    %c0_i32_1 = arith.constant 0 : i32
    return %c0_i32, %c0_i32_0 : i32, i32
  }
  func.func @transform_13(%arg0: i32) -> (i32, i32) {
    %c0_i32 = arith.constant 0 : i32
    %c0_i32_0 = arith.constant 0 : i32
    %c0_i32_1 = arith.constant 0 : i32
    return %c0_i32, %c0_i32_0 : i32, i32
  }
  func.func @transform_14(%arg0: i32) -> (i32, i32) {
    %c0_i32 = arith.constant 0 : i32
    %c0_i32_0 = arith.constant 0 : i32
    %c0_i32_1 = arith.constant 0 : i32
    return %c0_i32, %c0_i32_0 : i32, i32
  }
  func.func @transform_15(%arg0: i32) -> (i32, i32) {
    %c0_i32 = arith.constant 0 : i32
    %c0_i32_0 = arith.constant 0 : i32
    %c0_i32_1 = arith.constant 0 : i32
    return %c0_i32, %c0_i32_0 : i32, i32
  }
  func.func @transform_16(%arg0: i32) -> (i32, i32) {
    %c0_i32 = arith.constant 0 : i32
    %c0_i32_0 = arith.constant 0 : i32
    %c0_i32_1 = arith.constant 0 : i32
    return %c0_i32, %c0_i32_0 : i32, i32
  }
  func.func @transform_17(%arg0: i32) -> (i32, i32) {
    %c0_i32 = arith.constant 0 : i32
    %c0_i32_0 = arith.constant 0 : i32
    %c0_i32_1 = arith.constant 0 : i32
    return %c0_i32, %c0_i32_0 : i32, i32
  }
  func.func @transform_18(%arg0: i32) -> (i32, i32) {
    %c0_i32 = arith.constant 0 : i32
    %c0_i32_0 = arith.constant 0 : i32
    %c0_i32_1 = arith.constant 0 : i32
    return %c0_i32, %c0_i32_0 : i32, i32
  }
  func.func @transform_19(%arg0: i32) -> (i32, i32) {
    %c0_i32 = arith.constant 0 : i32
    %c0_i32_0 = arith.constant 0 : i32
    %c0_i32_1 = arith.constant 0 : i32
    return %c0_i32, %c0_i32_0 : i32, i32
  }
  func.func @transform_20(%arg0: i32) -> (i32, i32) {
    %c0_i32 = arith.constant 0 : i32
    %c0_i32_0 = arith.constant 0 : i32
    %c0_i32_1 = arith.constant 0 : i32
    return %c0_i32, %c0_i32_0 : i32, i32
  }
  func.func @transform_21(%arg0: i32) -> (i32, i32) {
    %c0_i32 = arith.constant 0 : i32
    %c0_i32_0 = arith.constant 0 : i32
    %c0_i32_1 = arith.constant 0 : i32
    return %c0_i32, %c0_i32_0 : i32, i32
  }
  func.func @transform_22(%arg0: i32) -> (i32, i32) {
    %c0_i32 = arith.constant 0 : i32
    %c0_i32_0 = arith.constant 0 : i32
    return %arg0, %c0_i32 : i32, i32
  }
}

module attributes {stable_mosaic.version = 11 : i64} {
  func.func @_vae_kernel(%arg0: i32, %arg1: memref<8x2xbf16, #tpu.memory_space<vmem>>, %arg2: memref<8x32xf32, #tpu.memory_space<vmem>>, %arg3: memref<2x32xbf16, #tpu.memory_space<vmem>>, %arg4: memref<1x32xf32, #tpu.memory_space<vmem>>, %arg5: memref<32x64xbf16, #tpu.memory_space<vmem>>, %arg6: memref<1x64xf32, #tpu.memory_space<vmem>>, %arg7: memref<64x128xbf16, #tpu.memory_space<vmem>>, %arg8: memref<1x128xf32, #tpu.memory_space<vmem>>, %arg9: memref<128x256xbf16, #tpu.memory_space<vmem>>, %arg10: memref<1x256xf32, #tpu.memory_space<vmem>>, %arg11: memref<256x64xbf16, #tpu.memory_space<vmem>>, %arg12: memref<1x64xf32, #tpu.memory_space<vmem>>, %arg13: memref<32x256xbf16, #tpu.memory_space<vmem>>, %arg14: memref<1x256xf32, #tpu.memory_space<vmem>>, %arg15: memref<256x128xbf16, #tpu.memory_space<vmem>>, %arg16: memref<1x128xf32, #tpu.memory_space<vmem>>, %arg17: memref<128x64xbf16, #tpu.memory_space<vmem>>, %arg18: memref<1x64xf32, #tpu.memory_space<vmem>>, %arg19: memref<64x32xbf16, #tpu.memory_space<vmem>>, %arg20: memref<1x32xf32, #tpu.memory_space<vmem>>, %arg21: memref<32x2xbf16, #tpu.memory_space<vmem>>, %arg22: memref<1x2xf32, #tpu.memory_space<vmem>>, %arg23: memref<8x128xf32, #tpu.memory_space<vmem>>) attributes {dimension_semantics = [#tpu.dimension_semantics<parallel>], iteration_bounds = array<i64: 1>, scalar_prefetch = 0 : i64, scratch_operands = 0 : i64, tpu.core_type = #tpu.core_type<tc>, window_params = [{transform_indices = @transform_0, window_bounds = array<i64: 8, 2>}, {transform_indices = @transform_1, window_bounds = array<i64: 8, 32>}, {pipeline_mode = #tpu.pipeline_mode<synchronous>, transform_indices = @transform_2, window_bounds = array<i64: 2, 32>}, {pipeline_mode = #tpu.pipeline_mode<synchronous>, transform_indices = @transform_3, window_bounds = array<i64: 1, 32>}, {pipeline_mode = #tpu.pipeline_mode<synchronous>, transform_indices = @transform_4, window_bounds = array<i64: 32, 64>}, {pipeline_mode = #tpu.pipeline_mode<synchronous>, transform_indices = @transform_5, window_bounds = array<i64: 1, 64>}, {pipeline_mode = #tpu.pipeline_mode<synchronous>, transform_indices = @transform_6, window_bounds = array<i64: 64, 128>}, {pipeline_mode = #tpu.pipeline_mode<synchronous>, transform_indices = @transform_7, window_bounds = array<i64: 1, 128>}, {pipeline_mode = #tpu.pipeline_mode<synchronous>, transform_indices = @transform_8, window_bounds = array<i64: 128, 256>}, {pipeline_mode = #tpu.pipeline_mode<synchronous>, transform_indices = @transform_9, window_bounds = array<i64: 1, 256>}, {pipeline_mode = #tpu.pipeline_mode<synchronous>, transform_indices = @transform_10, window_bounds = array<i64: 256, 64>}, {pipeline_mode = #tpu.pipeline_mode<synchronous>, transform_indices = @transform_11, window_bounds = array<i64: 1, 64>}, {pipeline_mode = #tpu.pipeline_mode<synchronous>, transform_indices = @transform_12, window_bounds = array<i64: 32, 256>}, {pipeline_mode = #tpu.pipeline_mode<synchronous>, transform_indices = @transform_13, window_bounds = array<i64: 1, 256>}, {pipeline_mode = #tpu.pipeline_mode<synchronous>, transform_indices = @transform_14, window_bounds = array<i64: 256, 128>}, {pipeline_mode = #tpu.pipeline_mode<synchronous>, transform_indices = @transform_15, window_bounds = array<i64: 1, 128>}, {pipeline_mode = #tpu.pipeline_mode<synchronous>, transform_indices = @transform_16, window_bounds = array<i64: 128, 64>}, {pipeline_mode = #tpu.pipeline_mode<synchronous>, transform_indices = @transform_17, window_bounds = array<i64: 1, 64>}, {pipeline_mode = #tpu.pipeline_mode<synchronous>, transform_indices = @transform_18, window_bounds = array<i64: 64, 32>}, {pipeline_mode = #tpu.pipeline_mode<synchronous>, transform_indices = @transform_19, window_bounds = array<i64: 1, 32>}, {pipeline_mode = #tpu.pipeline_mode<synchronous>, transform_indices = @transform_20, window_bounds = array<i64: 32, 2>}, {pipeline_mode = #tpu.pipeline_mode<synchronous>, transform_indices = @transform_21, window_bounds = array<i64: 1, 2>}, {transform_indices = @transform_22, window_bounds = array<i64: 8, 128>}]} {
    %c0 = arith.constant 0 : index
    %c0_0 = arith.constant 0 : index
    %0 = vector.load %arg1[%c0, %c0_0] : memref<8x2xbf16, #tpu.memory_space<vmem>>, vector<8x2xbf16>
    %c0_1 = arith.constant 0 : index
    %c0_2 = arith.constant 0 : index
    %1 = vector.load %arg3[%c0_1, %c0_2] : memref<2x32xbf16, #tpu.memory_space<vmem>>, vector<2x32xbf16>
    %cst = arith.constant dense<0.000000e+00> : vector<8x32xf32>
    %2 = tpu.matmul %0, %1, %cst {dimension_numbers = #tpu.dot_dimension_numbers<[1], [0], [0], [1], [0, 0, 1, 1], [], []>} : vector<8x2xbf16>, vector<2x32xbf16>, vector<8x32xf32> -> vector<8x32xf32>
    %c0_3 = arith.constant 0 : index
    %c0_4 = arith.constant 0 : index
    %3 = vector.load %arg4[%c0_3, %c0_4] : memref<1x32xf32, #tpu.memory_space<vmem>>, vector<1x32xf32>
    %4 = vector.broadcast %3 : vector<1x32xf32> to vector<8x32xf32>
    %5 = arith.addf %2, %4 : vector<8x32xf32>
    %cst_5 = arith.constant 0.000000e+00 : f32
    %6 = vector.broadcast %cst_5 : f32 to vector<8x32xf32>
    %7 = arith.maximumf %5, %6 : vector<8x32xf32>
    %8 = arith.truncf %7 : vector<8x32xf32> to vector<8x32xbf16>
    %c0_6 = arith.constant 0 : index
    %c0_7 = arith.constant 0 : index
    %9 = vector.load %arg5[%c0_6, %c0_7] : memref<32x64xbf16, #tpu.memory_space<vmem>>, vector<32x64xbf16>
    %cst_8 = arith.constant dense<0.000000e+00> : vector<8x64xf32>
    %10 = tpu.matmul %8, %9, %cst_8 {dimension_numbers = #tpu.dot_dimension_numbers<[1], [0], [0], [1], [0, 0, 1, 1], [], []>} : vector<8x32xbf16>, vector<32x64xbf16>, vector<8x64xf32> -> vector<8x64xf32>
    %c0_9 = arith.constant 0 : index
    %c0_10 = arith.constant 0 : index
    %11 = vector.load %arg6[%c0_9, %c0_10] : memref<1x64xf32, #tpu.memory_space<vmem>>, vector<1x64xf32>
    %12 = vector.broadcast %11 : vector<1x64xf32> to vector<8x64xf32>
    %13 = arith.addf %10, %12 : vector<8x64xf32>
    %cst_11 = arith.constant 0.000000e+00 : f32
    %14 = vector.broadcast %cst_11 : f32 to vector<8x64xf32>
    %15 = arith.maximumf %13, %14 : vector<8x64xf32>
    %16 = arith.truncf %15 : vector<8x64xf32> to vector<8x64xbf16>
    %c0_12 = arith.constant 0 : index
    %c0_13 = arith.constant 0 : index
    %17 = vector.load %arg7[%c0_12, %c0_13] : memref<64x128xbf16, #tpu.memory_space<vmem>>, vector<64x128xbf16>
    %cst_14 = arith.constant dense<0.000000e+00> : vector<8x128xf32>
    %18 = tpu.matmul %16, %17, %cst_14 {dimension_numbers = #tpu.dot_dimension_numbers<[1], [0], [0], [1], [0, 0, 1, 1], [], []>} : vector<8x64xbf16>, vector<64x128xbf16>, vector<8x128xf32> -> vector<8x128xf32>
    %c0_15 = arith.constant 0 : index
    %c0_16 = arith.constant 0 : index
    %19 = vector.load %arg8[%c0_15, %c0_16] : memref<1x128xf32, #tpu.memory_space<vmem>>, vector<1x128xf32>
    %20 = vector.broadcast %19 : vector<1x128xf32> to vector<8x128xf32>
    %21 = arith.addf %18, %20 : vector<8x128xf32>
    %cst_17 = arith.constant 0.000000e+00 : f32
    %22 = vector.broadcast %cst_17 : f32 to vector<8x128xf32>
    %23 = arith.maximumf %21, %22 : vector<8x128xf32>
    %24 = arith.truncf %23 : vector<8x128xf32> to vector<8x128xbf16>
    %c0_18 = arith.constant 0 : index
    %c0_19 = arith.constant 0 : index
    %25 = vector.load %arg9[%c0_18, %c0_19] : memref<128x256xbf16, #tpu.memory_space<vmem>>, vector<128x256xbf16>
    %cst_20 = arith.constant dense<0.000000e+00> : vector<8x256xf32>
    %26 = tpu.matmul %24, %25, %cst_20 {dimension_numbers = #tpu.dot_dimension_numbers<[1], [0], [0], [1], [0, 0, 1, 1], [], []>} : vector<8x128xbf16>, vector<128x256xbf16>, vector<8x256xf32> -> vector<8x256xf32>
    %c0_21 = arith.constant 0 : index
    %c0_22 = arith.constant 0 : index
    %27 = vector.load %arg10[%c0_21, %c0_22] : memref<1x256xf32, #tpu.memory_space<vmem>>, vector<1x256xf32>
    %28 = vector.broadcast %27 : vector<1x256xf32> to vector<8x256xf32>
    %29 = arith.addf %26, %28 : vector<8x256xf32>
    %cst_23 = arith.constant 0.000000e+00 : f32
    %30 = vector.broadcast %cst_23 : f32 to vector<8x256xf32>
    %31 = arith.maximumf %29, %30 : vector<8x256xf32>
    %32 = arith.truncf %31 : vector<8x256xf32> to vector<8x256xbf16>
    %c0_24 = arith.constant 0 : index
    %c0_25 = arith.constant 0 : index
    %33 = vector.load %arg11[%c0_24, %c0_25] : memref<256x64xbf16, #tpu.memory_space<vmem>>, vector<256x64xbf16>
    %cst_26 = arith.constant dense<0.000000e+00> : vector<8x64xf32>
    %34 = tpu.matmul %32, %33, %cst_26 {dimension_numbers = #tpu.dot_dimension_numbers<[1], [0], [0], [1], [0, 0, 1, 1], [], []>} : vector<8x256xbf16>, vector<256x64xbf16>, vector<8x64xf32> -> vector<8x64xf32>
    %c0_27 = arith.constant 0 : index
    %c0_28 = arith.constant 0 : index
    %35 = vector.load %arg12[%c0_27, %c0_28] : memref<1x64xf32, #tpu.memory_space<vmem>>, vector<1x64xf32>
    %36 = vector.broadcast %35 : vector<1x64xf32> to vector<8x64xf32>
    %37 = arith.addf %34, %36 : vector<8x64xf32>
    %38 = vector.extract_strided_slice %37 {offsets = [0, 0], sizes = [8, 32], strides = [1, 1]} : vector<8x64xf32> to vector<8x32xf32>
    %39 = vector.extract_strided_slice %37 {offsets = [0, 32], sizes = [8, 32], strides = [1, 1]} : vector<8x64xf32> to vector<8x32xf32>
    %cst_29 = arith.constant 5.000000e-01 : f32
    %40 = vector.broadcast %cst_29 : f32 to vector<8x32xf32>
    %41 = arith.mulf %40, %39 : vector<8x32xf32>
    %42 = math.exp %41 : vector<8x32xf32>
    %c0_30 = arith.constant 0 : index
    %c0_31 = arith.constant 0 : index
    %43 = vector.load %arg2[%c0_30, %c0_31] : memref<8x32xf32, #tpu.memory_space<vmem>>, vector<8x32xf32>
    %44 = arith.mulf %42, %43 : vector<8x32xf32>
    %45 = arith.addf %38, %44 : vector<8x32xf32>
    %46 = arith.truncf %45 : vector<8x32xf32> to vector<8x32xbf16>
    %c0_32 = arith.constant 0 : index
    %c0_33 = arith.constant 0 : index
    %47 = vector.load %arg13[%c0_32, %c0_33] : memref<32x256xbf16, #tpu.memory_space<vmem>>, vector<32x256xbf16>
    %cst_34 = arith.constant dense<0.000000e+00> : vector<8x256xf32>
    %48 = tpu.matmul %46, %47, %cst_34 {dimension_numbers = #tpu.dot_dimension_numbers<[1], [0], [0], [1], [0, 0, 1, 1], [], []>} : vector<8x32xbf16>, vector<32x256xbf16>, vector<8x256xf32> -> vector<8x256xf32>
    %c0_35 = arith.constant 0 : index
    %c0_36 = arith.constant 0 : index
    %49 = vector.load %arg14[%c0_35, %c0_36] : memref<1x256xf32, #tpu.memory_space<vmem>>, vector<1x256xf32>
    %50 = vector.broadcast %49 : vector<1x256xf32> to vector<8x256xf32>
    %51 = arith.addf %48, %50 : vector<8x256xf32>
    %52 = arith.truncf %51 : vector<8x256xf32> to vector<8x256xbf16>
    %c0_37 = arith.constant 0 : index
    %c0_38 = arith.constant 0 : index
    %53 = vector.load %arg15[%c0_37, %c0_38] : memref<256x128xbf16, #tpu.memory_space<vmem>>, vector<256x128xbf16>
    %cst_39 = arith.constant dense<0.000000e+00> : vector<8x128xf32>
    %54 = tpu.matmul %52, %53, %cst_39 {dimension_numbers = #tpu.dot_dimension_numbers<[1], [0], [0], [1], [0, 0, 1, 1], [], []>} : vector<8x256xbf16>, vector<256x128xbf16>, vector<8x128xf32> -> vector<8x128xf32>
    %c0_40 = arith.constant 0 : index
    %c0_41 = arith.constant 0 : index
    %55 = vector.load %arg16[%c0_40, %c0_41] : memref<1x128xf32, #tpu.memory_space<vmem>>, vector<1x128xf32>
    %56 = vector.broadcast %55 : vector<1x128xf32> to vector<8x128xf32>
    %57 = arith.addf %54, %56 : vector<8x128xf32>
    %cst_42 = arith.constant 0.000000e+00 : f32
    %58 = vector.broadcast %cst_42 : f32 to vector<8x128xf32>
    %59 = arith.maximumf %57, %58 : vector<8x128xf32>
    %60 = arith.truncf %59 : vector<8x128xf32> to vector<8x128xbf16>
    %c0_43 = arith.constant 0 : index
    %c0_44 = arith.constant 0 : index
    %61 = vector.load %arg17[%c0_43, %c0_44] : memref<128x64xbf16, #tpu.memory_space<vmem>>, vector<128x64xbf16>
    %cst_45 = arith.constant dense<0.000000e+00> : vector<8x64xf32>
    %62 = tpu.matmul %60, %61, %cst_45 {dimension_numbers = #tpu.dot_dimension_numbers<[1], [0], [0], [1], [0, 0, 1, 1], [], []>} : vector<8x128xbf16>, vector<128x64xbf16>, vector<8x64xf32> -> vector<8x64xf32>
    %c0_46 = arith.constant 0 : index
    %c0_47 = arith.constant 0 : index
    %63 = vector.load %arg18[%c0_46, %c0_47] : memref<1x64xf32, #tpu.memory_space<vmem>>, vector<1x64xf32>
    %64 = vector.broadcast %63 : vector<1x64xf32> to vector<8x64xf32>
    %65 = arith.addf %62, %64 : vector<8x64xf32>
    %cst_48 = arith.constant 0.000000e+00 : f32
    %66 = vector.broadcast %cst_48 : f32 to vector<8x64xf32>
    %67 = arith.maximumf %65, %66 : vector<8x64xf32>
    %68 = arith.truncf %67 : vector<8x64xf32> to vector<8x64xbf16>
    %c0_49 = arith.constant 0 : index
    %c0_50 = arith.constant 0 : index
    %69 = vector.load %arg19[%c0_49, %c0_50] : memref<64x32xbf16, #tpu.memory_space<vmem>>, vector<64x32xbf16>
    %cst_51 = arith.constant dense<0.000000e+00> : vector<8x32xf32>
    %70 = tpu.matmul %68, %69, %cst_51 {dimension_numbers = #tpu.dot_dimension_numbers<[1], [0], [0], [1], [0, 0, 1, 1], [], []>} : vector<8x64xbf16>, vector<64x32xbf16>, vector<8x32xf32> -> vector<8x32xf32>
    %c0_52 = arith.constant 0 : index
    %c0_53 = arith.constant 0 : index
    %71 = vector.load %arg20[%c0_52, %c0_53] : memref<1x32xf32, #tpu.memory_space<vmem>>, vector<1x32xf32>
    %72 = vector.broadcast %71 : vector<1x32xf32> to vector<8x32xf32>
    %73 = arith.addf %70, %72 : vector<8x32xf32>
    %cst_54 = arith.constant 0.000000e+00 : f32
    %74 = vector.broadcast %cst_54 : f32 to vector<8x32xf32>
    %75 = arith.maximumf %73, %74 : vector<8x32xf32>
    %76 = arith.truncf %75 : vector<8x32xf32> to vector<8x32xbf16>
    %c0_55 = arith.constant 0 : index
    %c0_56 = arith.constant 0 : index
    %77 = vector.load %arg21[%c0_55, %c0_56] : memref<32x2xbf16, #tpu.memory_space<vmem>>, vector<32x2xbf16>
    %cst_57 = arith.constant dense<0.000000e+00> : vector<8x2xf32>
    %78 = tpu.matmul %76, %77, %cst_57 {dimension_numbers = #tpu.dot_dimension_numbers<[1], [0], [0], [1], [0, 0, 1, 1], [], []>} : vector<8x32xbf16>, vector<32x2xbf16>, vector<8x2xf32> -> vector<8x2xf32>
    %c0_58 = arith.constant 0 : index
    %c0_59 = arith.constant 0 : index
    %79 = vector.load %arg22[%c0_58, %c0_59] : memref<1x2xf32, #tpu.memory_space<vmem>>, vector<1x2xf32>
    %80 = vector.broadcast %79 : vector<1x2xf32> to vector<8x2xf32>
    %81 = arith.addf %78, %80 : vector<8x2xf32>
    %cst_60 = arith.constant 0.000000e+00 : f32
    %82 = vector.broadcast %cst_60 : f32 to vector<8x2xf32>
    %83 = arith.subf %82, %81 : vector<8x2xf32>
    %84 = math.exp %83 : vector<8x2xf32>
    %cst_61 = arith.constant 1.000000e+00 : f32
    %85 = vector.broadcast %cst_61 : f32 to vector<8x2xf32>
    %86 = arith.addf %85, %84 : vector<8x2xf32>
    %87 = tpu.reciprocal %86 {approx = true} : vector<8x2xf32> -> vector<8x2xf32>
    %c0_62 = arith.constant 0 : index
    %c0_63 = arith.constant 0 : index
    %88 = vector.load %arg23[%c0_62, %c0_63] : memref<8x128xf32, #tpu.memory_space<vmem>>, vector<8x64xf32>
    tpu.vector_store %arg23[%c0_62, %c0_63], %37 {strides = array<i32>} : memref<8x128xf32, #tpu.memory_space<vmem>>, vector<8x64xf32>,
    %c0_64 = arith.constant 0 : index
    %c64 = arith.constant 64 : index
    %89 = vector.load %arg23[%c0_64, %c64] : memref<8x128xf32, #tpu.memory_space<vmem>>, vector<8x2xf32>
    tpu.vector_store %arg23[%c0_64, %c64], %87 {strides = array<i32>} : memref<8x128xf32, #tpu.memory_space<vmem>>, vector<8x2xf32>,
    %cst_65 = arith.constant 0.000000e+00 : f32
    %90 = vector.broadcast %cst_65 : f32 to vector<8x62xf32>
    %c0_66 = arith.constant 0 : index
    %c66 = arith.constant 66 : index
    %91 = vector.load %arg23[%c0_66, %c66] : memref<8x128xf32, #tpu.memory_space<vmem>>, vector<8x62xf32>
    tpu.vector_store %arg23[%c0_66, %c66], %90 {strides = array<i32>} : memref<8x128xf32, #tpu.memory_space<vmem>>, vector<8x62xf32>,
    return
  }
  func.func @transform_0(%arg0: i32) -> (i32, i32) {
    %c0_i32 = arith.constant 0 : i32
    %c0_i32_0 = arith.constant 0 : i32
    return %arg0, %c0_i32 : i32, i32
  }
  func.func @transform_1(%arg0: i32) -> (i32, i32) {
    %c0_i32 = arith.constant 0 : i32
    %c0_i32_0 = arith.constant 0 : i32
    return %arg0, %c0_i32 : i32, i32
  }
  func.func @transform_2(%arg0: i32) -> (i32, i32) {
    %c0_i32 = arith.constant 0 : i32
    %c0_i32_0 = arith.constant 0 : i32
    %c0_i32_1 = arith.constant 0 : i32
    return %c0_i32, %c0_i32_0 : i32, i32
  }
  func.func @transform_3(%arg0: i32) -> (i32, i32) {
    %c0_i32 = arith.constant 0 : i32
    %c0_i32_0 = arith.constant 0 : i32
    %c0_i32_1 = arith.constant 0 : i32
    return %c0_i32, %c0_i32_0 : i32, i32
  }
  func.func @transform_4(%arg0: i32) -> (i32, i32) {
    %c0_i32 = arith.constant 0 : i32
    %c0_i32_0 = arith.constant 0 : i32
    %c0_i32_1 = arith.constant 0 : i32
    return %c0_i32, %c0_i32_0 : i32, i32
  }
  func.func @transform_5(%arg0: i32) -> (i32, i32) {
    %c0_i32 = arith.constant 0 : i32
    %c0_i32_0 = arith.constant 0 : i32
    %c0_i32_1 = arith.constant 0 : i32
    return %c0_i32, %c0_i32_0 : i32, i32
  }
  func.func @transform_6(%arg0: i32) -> (i32, i32) {
    %c0_i32 = arith.constant 0 : i32
    %c0_i32_0 = arith.constant 0 : i32
    %c0_i32_1 = arith.constant 0 : i32
    return %c0_i32, %c0_i32_0 : i32, i32
  }
  func.func @transform_7(%arg0: i32) -> (i32, i32) {
    %c0_i32 = arith.constant 0 : i32
    %c0_i32_0 = arith.constant 0 : i32
    %c0_i32_1 = arith.constant 0 : i32
    return %c0_i32, %c0_i32_0 : i32, i32
  }
  func.func @transform_8(%arg0: i32) -> (i32, i32) {
    %c0_i32 = arith.constant 0 : i32
    %c0_i32_0 = arith.constant 0 : i32
    %c0_i32_1 = arith.constant 0 : i32
    return %c0_i32, %c0_i32_0 : i32, i32
  }
  func.func @transform_9(%arg0: i32) -> (i32, i32) {
    %c0_i32 = arith.constant 0 : i32
    %c0_i32_0 = arith.constant 0 : i32
    %c0_i32_1 = arith.constant 0 : i32
    return %c0_i32, %c0_i32_0 : i32, i32
  }
  func.func @transform_10(%arg0: i32) -> (i32, i32) {
    %c0_i32 = arith.constant 0 : i32
    %c0_i32_0 = arith.constant 0 : i32
    %c0_i32_1 = arith.constant 0 : i32
    return %c0_i32, %c0_i32_0 : i32, i32
  }
  func.func @transform_11(%arg0: i32) -> (i32, i32) {
    %c0_i32 = arith.constant 0 : i32
    %c0_i32_0 = arith.constant 0 : i32
    %c0_i32_1 = arith.constant 0 : i32
    return %c0_i32, %c0_i32_0 : i32, i32
  }
  func.func @transform_12(%arg0: i32) -> (i32, i32) {
    %c0_i32 = arith.constant 0 : i32
    %c0_i32_0 = arith.constant 0 : i32
    %c0_i32_1 = arith.constant 0 : i32
    return %c0_i32, %c0_i32_0 : i32, i32
  }
  func.func @transform_13(%arg0: i32) -> (i32, i32) {
    %c0_i32 = arith.constant 0 : i32
    %c0_i32_0 = arith.constant 0 : i32
    %c0_i32_1 = arith.constant 0 : i32
    return %c0_i32, %c0_i32_0 : i32, i32
  }
  func.func @transform_14(%arg0: i32) -> (i32, i32) {
    %c0_i32 = arith.constant 0 : i32
    %c0_i32_0 = arith.constant 0 : i32
    %c0_i32_1 = arith.constant 0 : i32
    return %c0_i32, %c0_i32_0 : i32, i32
  }
  func.func @transform_15(%arg0: i32) -> (i32, i32) {
    %c0_i32 = arith.constant 0 : i32
    %c0_i32_0 = arith.constant 0 : i32
    %c0_i32_1 = arith.constant 0 : i32
    return %c0_i32, %c0_i32_0 : i32, i32
  }
  func.func @transform_16(%arg0: i32) -> (i32, i32) {
    %c0_i32 = arith.constant 0 : i32
    %c0_i32_0 = arith.constant 0 : i32
    %c0_i32_1 = arith.constant 0 : i32
    return %c0_i32, %c0_i32_0 : i32, i32
  }
  func.func @transform_17(%arg0: i32) -> (i32, i32) {
    %c0_i32 = arith.constant 0 : i32
    %c0_i32_0 = arith.constant 0 : i32
    %c0_i32_1 = arith.constant 0 : i32
    return %c0_i32, %c0_i32_0 : i32, i32
  }
  func.func @transform_18(%arg0: i32) -> (i32, i32) {
    %c0_i32 = arith.constant 0 : i32
    %c0_i32_0 = arith.constant 0 : i32
    %c0_i32_1 = arith.constant 0 : i32
    return %c0_i32, %c0_i32_0 : i32, i32
  }
  func.func @transform_19(%arg0: i32) -> (i32, i32) {
    %c0_i32 = arith.constant 0 : i32
    %c0_i32_0 = arith.constant 0 : i32
    %c0_i32_1 = arith.constant 0 : i32
    return %c0_i32, %c0_i32_0 : i32, i32
  }
  func.func @transform_20(%arg0: i32) -> (i32, i32) {
    %c0_i32 = arith.constant 0 : i32
    %c0_i32_0 = arith.constant 0 : i32
    %c0_i32_1 = arith.constant 0 : i32
    return %c0_i32, %c0_i32_0 : i32, i32
  }
  func.func @transform_21(%arg0: i32) -> (i32, i32) {
    %c0_i32 = arith.constant 0 : i32
    %c0_i32_0 = arith.constant 0 : i32
    %c0_i32_1 = arith.constant 0 : i32
    return %c0_i32, %c0_i32_0 : i32, i32
  }
  func.func @transform_22(%arg0: i32) -> (i32, i32) {
    %c0_i32 = arith.constant 0 : i32
    %c0_i32_0 = arith.constant 0 : i32
    return %arg0, %c0_i32 : i32, i32
  }
}

</mosaic_0001>

<llo_original>
// kernel: tpu_custom_call.1
$region0: #{tpu_custom_call.1}
  #allocation0 [shape = 'u32[]', space=smem, size = 0x4, offset = 0x4, fixed_abs, tag = 'smem constant byte address 0x4 - core index']
  #allocation1 [shape = 'u32[72,128]{1,0:T(1,128)}', space=vmem, size = 0x9000, scoped, tag = 'internal scratch']
  %s0 = inlined_call_operand.vmem [shape: bf16[8,2], index: 0, kind: input, shape index: {}]
  %s1 = inlined_call_operand.hbm [shape: f32[8,32], index: 1, kind: input, shape index: {}]
  %s2 = inlined_call_operand.hbm [shape: bf16[2,32], index: 2, kind: input, shape index: {}]
  %s3 = inlined_call_operand.hbm [shape: f32[1,32], index: 3, kind: input, shape index: {}]
  %s4 = inlined_call_operand.hbm [shape: bf16[32,64], index: 4, kind: input, shape index: {}]
  %s5 = inlined_call_operand.hbm [shape: f32[1,64], index: 5, kind: input, shape index: {}]
  %s6 = inlined_call_operand.hbm [shape: bf16[64,128], index: 6, kind: input, shape index: {}]
  %s7 = inlined_call_operand.hbm [shape: f32[1,128], index: 7, kind: input, shape index: {}]
  %s8 = inlined_call_operand.vmem [shape: bf16[128,256], index: 8, kind: input, shape index: {}]
  %s9 = inlined_call_operand.hbm [shape: f32[1,256], index: 9, kind: input, shape index: {}]
  %s10 = inlined_call_operand.vmem [shape: bf16[256,64], index: 10, kind: input, shape index: {}]
  %s11 = inlined_call_operand.hbm [shape: f32[1,64], index: 11, kind: input, shape index: {}]
  %s12 = inlined_call_operand.hbm [shape: bf16[32,256], index: 12, kind: input, shape index: {}]
  %s13 = inlined_call_operand.hbm [shape: f32[1,256], index: 13, kind: input, shape index: {}]
  %s14 = inlined_call_operand.vmem [shape: bf16[256,128], index: 14, kind: input, shape index: {}]
  %s15 = inlined_call_operand.vmem [shape: f32[1,128], index: 15, kind: input, shape index: {}]
  %s16 = inlined_call_operand.vmem [shape: bf16[128,64], index: 16, kind: input, shape index: {}]
  %s17 = inlined_call_operand.vmem [shape: f32[1,64], index: 17, kind: input, shape index: {}]
  %s18 = inlined_call_operand.vmem [shape: bf16[64,32], index: 18, kind: input, shape index: {}]
  %s19 = inlined_call_operand.vmem [shape: f32[1,32], index: 19, kind: input, shape index: {}]
  %s20 = inlined_call_operand.vmem [shape: bf16[32,2], index: 20, kind: input, shape index: {}]
  %s21 = inlined_call_operand.vmem [shape: f32[1,2], index: 21, kind: input, shape index: {}]
  %s22 = inlined_call_operand.hbm [shape: f32[8,128], index: 22, kind: output, shape index: {}]
  %s23 = sld [smem:[#allocation0]]
  $region142: #{tpu_custom_call.1} parent=0
    _
  %s25 = ssub.s32 1, %s23
  %s26 = scalar_select 0, %s25, %s23
  $region1: #{tpu_custom_call.1} parent=0
    #allocation2 [shape = 'u8[4096]{0}', space=vmem, size = 0x1000, scoped, tag = 'input window, operand 1, single buffered']
    #allocation3 [shape = 's32[1]{0}', space=sflag, size = 0x4, scoped, tag = 'scoped memory for tpu_custom_call.1']
    #allocation4 [shape = 's32[1]{0}', space=sflag, size = 0x4, scoped, tag = 'scoped memory for tpu_custom_call.1']
    #allocation5 [shape = 'u8[512]{0}', space=vmem, size = 0x400, scoped, tag = 'input window, operand 2, single buffered']
    #allocation6 [shape = 's32[1]{0}', space=sflag, size = 0x4, scoped, tag = 'scoped memory for tpu_custom_call.1']
    #allocation7 [shape = 'u8[512]{0}', space=vmem, size = 0x400, scoped, tag = 'input window, operand 3, single buffered']
    #allocation8 [shape = 'u8[8192]{0}', space=vmem, size = 0x2000, scoped, tag = 'input window, operand 4, single buffered']
    #allocation9 [shape = 's32[1]{0}', space=sflag, size = 0x4, scoped, tag = 'scoped memory for tpu_custom_call.1']
    #allocation10 [shape = 'u8[512]{0}', space=vmem, size = 0x400, scoped, tag = 'input window, operand 5, single buffered']
    #allocation11 [shape = 'u8[16384]{0}', space=vmem, size = 0x4000, scoped, tag = 'input window, operand 6, single buffered']
    #allocation12 [shape = 's32[1]{0}', space=sflag, size = 0x4, scoped, tag = 'scoped memory for tpu_custom_call.1']
    #allocation13 [shape = 'u8[512]{0}', space=vmem, size = 0x400, scoped, tag = 'input window, operand 7, single buffered']
    #allocation14 [shape = 'u8[1024]{0}', space=vmem, size = 0x400, scoped, tag = 'input window, operand 9, single buffered']
    #allocation15 [shape = 's32[1]{0}', space=sflag, size = 0x4, scoped, tag = 'scoped memory for tpu_custom_call.1']
    #allocation16 [shape = 'u8[512]{0}', space=vmem, size = 0x400, scoped, tag = 'input window, operand 11, single buffered']
    #allocation17 [shape = 'u8[16384]{0}', space=vmem, size = 0x4000, scoped, tag = 'input window, operand 12, single buffered']
    #allocation18 [shape = 's32[1]{0}', space=sflag, size = 0x4, scoped, tag = 'scoped memory for tpu_custom_call.1']
    #allocation19 [shape = 'u8[1024]{0}', space=vmem, size = 0x400, scoped, tag = 'input window, operand 13, single buffered']
    #allocation20 [shape = 'u8[4096]{0}', space=vmem, size = 0x1000, scoped, tag = 'output window, operand 0, single buffered']
    %27 = vsyncpa [#allocation3], 0
    %28 = vsyncpa [#allocation6], 0
    %29 = vsyncpa [#allocation9], 0
    %30 = vsyncpa [#allocation12], 0
    %31 = vsyncpa [#allocation15], 0
    %32 = vsyncpa [#allocation18], 0
    %33 = vsyncpa [#allocation4], 0
    // Predicated region
    $region2: #{tpu_custom_call.1} parent=1 // pred_check
      _
    $region3: #{tpu_custom_call.1} parent=1 // pred_check_branch
      %35 = sbr.rel (0) target = $region5
    $region4: #{tpu_custom_call.1} parent=1 // pred_region
      _
    $region5: #{tpu_custom_call.1} parent=1 // pred_fallthru
      _
    // Predicated region
    $region6: #{tpu_custom_call.1} parent=1 // pred_check
      _
    $region7: #{tpu_custom_call.1} parent=1 // pred_check_branch
      %37 = sbr.rel (0) target = $region9
    $region8: #{tpu_custom_call.1} parent=1 // pred_region
      %39 = vsyncadd [#allocation3], 0
      %s41 = sshll.u32 %s1, 4
      %s42 = int_to_ptr.hbm [resolvable:$true] %s41
      %s43 = sshll.u32 [#allocation2], 4
      %s44 = int_to_ptr.vmem [resolvable:$true] %s43
      %46 = dma.hbm_to_vmem [thread:$0]  %s42, 128, %s44, [#allocation3]
    $region9: #{tpu_custom_call.1} parent=1 // pred_fallthru
      _
    // Predicated region
    $region10: #{tpu_custom_call.1} parent=1 // pred_check
      _
    $region11: #{tpu_custom_call.1} parent=1 // pred_check_branch
      %48 = sbr.rel (0) target = $region13
    $region12: #{tpu_custom_call.1} parent=1 // pred_region
      %50 = vsyncadd [#allocation6], 0
      %s52 = sshll.u32 %s2, 4
      %s53 = int_to_ptr.hbm [resolvable:$true] %s52
      %s54 = sshll.u32 [#allocation5], 4
      %s55 = int_to_ptr.vmem [resolvable:$true] %s54
      %57 = dma.hbm_to_vmem [thread:$0]  %s53, 16, %s55, [#allocation6]
    $region13: #{tpu_custom_call.1} parent=1 // pred_fallthru
      _
    // Predicated region
    $region14: #{tpu_custom_call.1} parent=1 // pred_check
      _
    $region15: #{tpu_custom_call.1} parent=1 // pred_check_branch
      %59 = sbr.rel (0) target = $region17
    $region16: #{tpu_custom_call.1} parent=1 // pred_region
      %61 = vsyncadd [#allocation6], 0
      %s63 = sshll.u32 %s3, 4
      %s64 = int_to_ptr.hbm [resolvable:$true] %s63
      %s65 = sshll.u32 [#allocation7], 4
      %s66 = int_to_ptr.vmem [resolvable:$true] %s65
      %68 = dma.hbm_to_vmem [thread:$0]  %s64, 16, %s66, [#allocation6]
    $region17: #{tpu_custom_call.1} parent=1 // pred_fallthru
      _
    // Predicated region
    $region18: #{tpu_custom_call.1} parent=1 // pred_check
      _
    $region19: #{tpu_custom_call.1} parent=1 // pred_check_branch
      %70 = sbr.rel (0) target = $region21
    $region20: #{tpu_custom_call.1} parent=1 // pred_region
      %72 = vsyncadd [#allocation9], 0
      %s73 = sshll.u32 %s4, 4
      %s74 = int_to_ptr.hbm [resolvable:$true] %s73
      %s75 = sshll.u32 [#allocation8], 4
      %s76 = int_to_ptr.vmem [resolvable:$true] %s75
      %81 = dma.hbm_to_vmem [thread:$0]  %s74, 256, %s76, [#allocation9], 64, 64, 4
    $region21: #{tpu_custom_call.1} parent=1 // pred_fallthru
      _
    // Predicated region
    $region22: #{tpu_custom_call.1} parent=1 // pred_check
      _
    $region23: #{tpu_custom_call.1} parent=1 // pred_check_branch
      %83 = sbr.rel (0) target = $region25
    $region24: #{tpu_custom_call.1} parent=1 // pred_region
      %85 = vsyncadd [#allocation9], 0
      %s87 = sshll.u32 %s5, 4
      %s88 = int_to_ptr.hbm [resolvable:$true] %s87
      %s89 = sshll.u32 [#allocation10], 4
      %s90 = int_to_ptr.vmem [resolvable:$true] %s89
      %92 = dma.hbm_to_vmem [thread:$0]  %s88, 16, %s90, [#allocation9]
    $region25: #{tpu_custom_call.1} parent=1 // pred_fallthru
      _
    // Predicated region
    $region26: #{tpu_custom_call.1} parent=1 // pred_check
      _
    $region27: #{tpu_custom_call.1} parent=1 // pred_check_branch
      %94 = sbr.rel (0) target = $region29
    $region28: #{tpu_custom_call.1} parent=1 // pred_region
      %96 = vsyncadd [#allocation12], 0
      %s97 = sshll.u32 %s6, 4
      %s98 = int_to_ptr.hbm [resolvable:$true] %s97
      %s99 = sshll.u32 [#allocation11], 4
      %s100 = int_to_ptr.vmem [resolvable:$true] %s99
      %105 = dma.hbm_to_vmem [thread:$0]  %s98, 512, %s100, [#allocation12], 64, 64, 4
    $region29: #{tpu_custom_call.1} parent=1 // pred_fallthru
      _
    // Predicated region
    $region30: #{tpu_custom_call.1} parent=1 // pred_check
      _
    $region31: #{tpu_custom_call.1} parent=1 // pred_check_branch
      %107 = sbr.rel (0) target = $region33
    $region32: #{tpu_custom_call.1} parent=1 // pred_region
      %109 = vsyncadd [#allocation12], 0
      %s111 = sshll.u32 %s7, 4
      %s112 = int_to_ptr.hbm [resolvable:$true] %s111
      %s113 = sshll.u32 [#allocation13], 4
      %s114 = int_to_ptr.vmem [resolvable:$true] %s113
      %116 = dma.hbm_to_vmem [thread:$0]  %s112, 16, %s114, [#allocation12]
    $region33: #{tpu_custom_call.1} parent=1 // pred_fallthru
      _
    // Predicated region
    $region34: #{tpu_custom_call.1} parent=1 // pred_check
      _
    $region35: #{tpu_custom_call.1} parent=1 // pred_check_branch
      %118 = sbr.rel (0) target = $region37
    $region36: #{tpu_custom_call.1} parent=1 // pred_region
      _
    $region37: #{tpu_custom_call.1} parent=1 // pred_fallthru
      _
    // Predicated region
    $region38: #{tpu_custom_call.1} parent=1 // pred_check
      _
    $region39: #{tpu_custom_call.1} parent=1 // pred_check_branch
      %120 = sbr.rel (0) target = $region41
    $region40: #{tpu_custom_call.1} parent=1 // pred_region
      %122 = vsyncadd [#allocation15], 0
      %s124 = sshll.u32 %s9, 4
      %s125 = int_to_ptr.hbm [resolvable:$true] %s124
      %s126 = sshll.u32 [#allocation14], 4
      %s127 = int_to_ptr.vmem [resolvable:$true] %s126
      %129 = dma.hbm_to_vmem [thread:$0]  %s125, 32, %s127, [#allocation15]
    $region41: #{tpu_custom_call.1} parent=1 // pred_fallthru
      _
    // Predicated region
    $region42: #{tpu_custom_call.1} parent=1 // pred_check
      _
    $region43: #{tpu_custom_call.1} parent=1 // pred_check_branch
      %131 = sbr.rel (0) target = $region45
    $region44: #{tpu_custom_call.1} parent=1 // pred_region
      _
    $region45: #{tpu_custom_call.1} parent=1 // pred_fallthru
      _
    // Predicated region
    $region46: #{tpu_custom_call.1} parent=1 // pred_check
      _
    $region47: #{tpu_custom_call.1} parent=1 // pred_check_branch
      %133 = sbr.rel (0) target = $region49
    $region48: #{tpu_custom_call.1} parent=1 // pred_region
      %135 = vsyncadd [#allocation15], 0
      %s137 = sshll.u32 %s11, 4
      %s138 = int_to_ptr.hbm [resolvable:$true] %s137
      %s139 = sshll.u32 [#allocation16], 4
      %s140 = int_to_ptr.vmem [resolvable:$true] %s139
      %142 = dma.hbm_to_vmem [thread:$0]  %s138, 16, %s140, [#allocation15]
    $region49: #{tpu_custom_call.1} parent=1 // pred_fallthru
      _
    // Predicated region
    $region50: #{tpu_custom_call.1} parent=1 // pred_check
      _
    $region51: #{tpu_custom_call.1} parent=1 // pred_check_branch
      %144 = sbr.rel (0) target = $region53
    $region52: #{tpu_custom_call.1} parent=1 // pred_region
      %146 = vsyncadd [#allocation18], 0
      %s147 = sshll.u32 %s12, 4
      %s148 = int_to_ptr.hbm [resolvable:$true] %s147
      %s149 = sshll.u32 [#allocation17], 4
      %s150 = int_to_ptr.vmem [resolvable:$true] %s149
      %155 = dma.hbm_to_vmem [thread:$0]  %s148, 512, %s150, [#allocation18], 128, 128, 8
    $region53: #{tpu_custom_call.1} parent=1 // pred_fallthru
      _
    // Predicated region
    $region54: #{tpu_custom_call.1} parent=1 // pred_check
      _
    $region55: #{tpu_custom_call.1} parent=1 // pred_check_branch
      %157 = sbr.rel (0) target = $region57
    $region56: #{tpu_custom_call.1} parent=1 // pred_region
      %159 = vsyncadd [#allocation18], 0
      %s161 = sshll.u32 %s13, 4
      %s162 = int_to_ptr.hbm [resolvable:$true] %s161
      %s163 = sshll.u32 [#allocation19], 4
      %s164 = int_to_ptr.vmem [resolvable:$true] %s163
      %166 = dma.hbm_to_vmem [thread:$0]  %s162, 32, %s164, [#allocation18]
    $region57: #{tpu_custom_call.1} parent=1 // pred_fallthru
      _
    // Predicated region
    $region58: #{tpu_custom_call.1} parent=1 // pred_check
      _
    $region59: #{tpu_custom_call.1} parent=1 // pred_check_branch
      %168 = sbr.rel (0) target = $region61
    $region60: #{tpu_custom_call.1} parent=1 // pred_region
      _
    $region61: #{tpu_custom_call.1} parent=1 // pred_fallthru
      _
    // Predicated region
    $region62: #{tpu_custom_call.1} parent=1 // pred_check
      _
    $region63: #{tpu_custom_call.1} parent=1 // pred_check_branch
      %170 = sbr.rel (0) target = $region65
    $region64: #{tpu_custom_call.1} parent=1 // pred_region
      _
    $region65: #{tpu_custom_call.1} parent=1 // pred_fallthru
      _
    // Predicated region
    $region66: #{tpu_custom_call.1} parent=1 // pred_check
      _
    $region67: #{tpu_custom_call.1} parent=1 // pred_check_branch
      %172 = sbr.rel (0) target = $region69
    $region68: #{tpu_custom_call.1} parent=1 // pred_region
      _
    $region69: #{tpu_custom_call.1} parent=1 // pred_fallthru
      _
    // Predicated region
    $region70: #{tpu_custom_call.1} parent=1 // pred_check
      _
    $region71: #{tpu_custom_call.1} parent=1 // pred_check_branch
      %174 = sbr.rel (0) target = $region73
    $region72: #{tpu_custom_call.1} parent=1 // pred_region
      _
    $region73: #{tpu_custom_call.1} parent=1 // pred_fallthru
      _
    // Predicated region
    $region74: #{tpu_custom_call.1} parent=1 // pred_check
      _
    $region75: #{tpu_custom_call.1} parent=1 // pred_check_branch
      %176 = sbr.rel (0) target = $region77
    $region76: #{tpu_custom_call.1} parent=1 // pred_region
      _
    $region77: #{tpu_custom_call.1} parent=1 // pred_fallthru
      _
    // Predicated region
    $region78: #{tpu_custom_call.1} parent=1 // pred_check
      _
    $region79: #{tpu_custom_call.1} parent=1 // pred_check_branch
      %178 = sbr.rel (0) target = $region81
    $region80: #{tpu_custom_call.1} parent=1 // pred_region
      _
    $region81: #{tpu_custom_call.1} parent=1 // pred_fallthru
      _
    // Predicated region
    $region82: #{tpu_custom_call.1} parent=1 // pred_check
      _
    $region83: #{tpu_custom_call.1} parent=1 // pred_check_branch
      %180 = sbr.rel (0) target = $region85
    $region84: #{tpu_custom_call.1} parent=1 // pred_region
      _
    $region85: #{tpu_custom_call.1} parent=1 // pred_fallthru
      _
    // Predicated region
    $region86: #{tpu_custom_call.1} parent=1 // pred_check
      _
    $region87: #{tpu_custom_call.1} parent=1 // pred_check_branch
      %182 = sbr.rel (0) target = $region89
    $region88: #{tpu_custom_call.1} parent=1 // pred_region
      _
    $region89: #{tpu_custom_call.1} parent=1 // pred_fallthru
      _
    // Predicated region
    $region90: #{tpu_custom_call.1} parent=1 // pred_check
      _
    $region91: #{tpu_custom_call.1} parent=1 // pred_check_branch
      %184 = sbr.rel (0) target = $region93
    $region92: #{tpu_custom_call.1} parent=1 // pred_region
      %186 = dma.done [#allocation3], 128
    $region93: #{tpu_custom_call.1} parent=1 // pred_fallthru
      _
    // Predicated region
    $region94: #{tpu_custom_call.1} parent=1 // pred_check
      _
    $region95: #{tpu_custom_call.1} parent=1 // pred_check_branch
      %188 = sbr.rel (0) target = $region97
    $region96: #{tpu_custom_call.1} parent=1 // pred_region
      %190 = dma.done [#allocation6], 16
    $region97: #{tpu_custom_call.1} parent=1 // pred_fallthru
      _
    // Predicated region
    $region98: #{tpu_custom_call.1} parent=1 // pred_check
      _
    $region99: #{tpu_custom_call.1} parent=1 // pred_check_branch
      %192 = sbr.rel (0) target = $region101
    $region100: #{tpu_custom_call.1} parent=1 // pred_region
      %194 = dma.done [#allocation6], 16
    $region101: #{tpu_custom_call.1} parent=1 // pred_fallthru
      _
    // Predicated region
    $region102: #{tpu_custom_call.1} parent=1 // pred_check
      _
    $region103: #{tpu_custom_call.1} parent=1 // pred_check_branch
      %196 = sbr.rel (0) target = $region105
    $region104: #{tpu_custom_call.1} parent=1 // pred_region
      %198 = dma.done [#allocation9], 256
    $region105: #{tpu_custom_call.1} parent=1 // pred_fallthru
      _
    // Predicated region
    $region106: #{tpu_custom_call.1} parent=1 // pred_check
      _
    $region107: #{tpu_custom_call.1} parent=1 // pred_check_branch
      %200 = sbr.rel (0) target = $region109
    $region108: #{tpu_custom_call.1} parent=1 // pred_region
      %202 = dma.done [#allocation9], 16
    $region109: #{tpu_custom_call.1} parent=1 // pred_fallthru
      _
    // Predicated region
    $region110: #{tpu_custom_call.1} parent=1 // pred_check
      _
    $region111: #{tpu_custom_call.1} parent=1 // pred_check_branch
      %204 = sbr.rel (0) target = $region113
    $region112: #{tpu_custom_call.1} parent=1 // pred_region
      %206 = dma.done [#allocation12], 512
    $region113: #{tpu_custom_call.1} parent=1 // pred_fallthru
      _
    // Predicated region
    $region114: #{tpu_custom_call.1} parent=1 // pred_check
      _
    $region115: #{tpu_custom_call.1} parent=1 // pred_check_branch
      %208 = sbr.rel (0) target = $region117
    $region116: #{tpu_custom_call.1} parent=1 // pred_region
      %210 = dma.done [#allocation12], 16
    $region117: #{tpu_custom_call.1} parent=1 // pred_fallthru
      _
    // Predicated region
    $region118: #{tpu_custom_call.1} parent=1 // pred_check
      _
    $region119: #{tpu_custom_call.1} parent=1 // pred_check_branch
      %212 = sbr.rel (0) target = $region121
    $region120: #{tpu_custom_call.1} parent=1 // pred_region
      %214 = dma.done [#allocation15], 32
    $region121: #{tpu_custom_call.1} parent=1 // pred_fallthru
      _
    // Predicated region
    $region122: #{tpu_custom_call.1} parent=1 // pred_check
      _
    $region123: #{tpu_custom_call.1} parent=1 // pred_check_branch
      %216 = sbr.rel (0) target = $region125
    $region124: #{tpu_custom_call.1} parent=1 // pred_region
      %218 = dma.done [#allocation15], 16
    $region125: #{tpu_custom_call.1} parent=1 // pred_fallthru
      _
    // Predicated region
    $region126: #{tpu_custom_call.1} parent=1 // pred_check
      _
    $region127: #{tpu_custom_call.1} parent=1 // pred_check_branch
      %220 = sbr.rel (0) target = $region129
    $region128: #{tpu_custom_call.1} parent=1 // pred_region
      %222 = dma.done [#allocation18], 512
    $region129: #{tpu_custom_call.1} parent=1 // pred_fallthru
      _
    // Predicated region
    $region130: #{tpu_custom_call.1} parent=1 // pred_check
      _
    $region131: #{tpu_custom_call.1} parent=1 // pred_check_branch
      %224 = sbr.rel (0) target = $region133
    $region132: #{tpu_custom_call.1} parent=1 // pred_region
      %226 = dma.done [#allocation18], 32
    $region133: #{tpu_custom_call.1} parent=1 // pred_fallthru
      _
    %v228 = vld [vmem:[%s0] sm:$0xf]
    %v229 = vld [vmem:[#allocation5] sm:$0x1]
    %v230 = vld [vmem:[#allocation7] sm:$0x1]
    %v232 = vperm.slane %v230, 0
    %vm234 = vcmask 15360
    %v236 = vsel %vm234, %v228, 0
    %vm238 = vcmask 1040384
    %v240 = vsel %vm238, %v229, 0
    %242 = vmatpush.bf16.msra.mxu0 0
    %243 = vmatpush.bf16.msra.mxu0 0
    %244 = vmatpush.bf16.msra.mxu0 0
    %245 = vmatpush.bf16.msra.mxu0 0
    %246 = vmatpush.bf16.msra.mxu0 0
    %247 = vmatpush.bf16.msra.mxu0 0
    %248 = vmatpush.bf16.msra.mxu0 0
    %249 = vmatpush.bf16.msra.mxu0 %v240
    %250 = vmatmul.bf16.gmra.mxu0 %v236
    %v251 = vpop.f32.mrf.mxu0
    %v252 = vadd.f32 %v232, %v251
    %v253 = vpop.f32.mrf.mxu0
    %254 = vdwg.mxu0
    %v255 = vmax.f32 %v252, 0.0
    %v256 = vpack.c.bf16 %v255, %v255
    %v257 = vld [vmem:[#allocation8] sm:$0xf]
    %v258 = vld [vmem:[#allocation8 + $0x4] sm:$0xf]
    %v259 = vld [vmem:[#allocation8 + $0x8] sm:$0xf]
    %v260 = vld [vmem:[#allocation8 + $0xc] sm:$0xf]
    %v261 = vld [vmem:[#allocation10] sm:$0x1]
    %v263 = vperm.slane %v261, 0
    %v269 = vunpack.c.l.b16 %v257
    %v270 = vunpack.c.l.b16 %v258
    %v271 = vunpack.c.l.b16 %v259
    %v272 = vunpack.c.l.b16 %v260
    %v273 = vpack.c.b16 %v270, %v269
    %v274 = vpack.c.b16 %v272, %v271
    %vm277 = vcmask 261120
    %v279 = vsel %vm277, %v256, 0
    %281 = vmatpush.bf16.msra.mxu0 0
    %282 = vmatpush.bf16.msra.mxu0 0
    %283 = vmatpush.bf16.msra.mxu0 0
    %284 = vmatpush.bf16.msra.mxu0 0
    %285 = vmatpush.bf16.msra.mxu0 0
    %286 = vmatpush.bf16.msra.mxu0 0
    %287 = vmatpush.bf16.msra.mxu0 %v274
    %288 = vmatpush.bf16.msra.mxu0 %v273
    %289 = vmatmul.bf16.gmra.mxu0 %v279
    %v290 = vpop.f32.mrf.mxu0
    %v291 = vadd.f32 %v263, %v290
    %v292 = vpop.f32.mrf.mxu0
    %293 = vdwg.mxu0
    %v294 = vmax.f32 %v291, 0.0
    %v295 = vpack.c.bf16 %v294, %v294
    %v296 = vld [vmem:[#allocation11] sm:$0xf]
    %v297 = vld [vmem:[#allocation11 + $0x4] sm:$0xf]
    %v298 = vld [vmem:[#allocation11 + $0x8] sm:$0xf]
    %v299 = vld [vmem:[#allocation11 + $0xc] sm:$0xf]
    %v300 = vld [vmem:[#allocation11 + $0x10] sm:$0xf]
    %v301 = vld [vmem:[#allocation11 + $0x14] sm:$0xf]
    %v302 = vld [vmem:[#allocation11 + $0x18] sm:$0xf]
    %v303 = vld [vmem:[#allocation11 + $0x1c] sm:$0xf]
    %v304 = vld [vmem:[#allocation13] sm:$0x1]
    %v306 = vperm.slane %v304, 0
    %v316 = vunpack.c.l.b16 %v296
    %v317 = vunpack.c.l.b16 %v297
    %v318 = vunpack.c.l.b16 %v298
    %v319 = vunpack.c.l.b16 %v299
    %v320 = vunpack.c.l.b16 %v300
    %v321 = vunpack.c.l.b16 %v301
    %v322 = vunpack.c.l.b16 %v302
    %v323 = vunpack.c.l.b16 %v303
    %v324 = vpack.c.b16 %v317, %v316
    %v325 = vpack.c.b16 %v319, %v318
    %v326 = vpack.c.b16 %v321, %v320
    %v327 = vpack.c.b16 %v323, %v322
    %vm332 = vcmask 523264
    %v334 = vsel %vm332, %v295, 0
    %336 = vmatpush.bf16.msra.mxu0 0
    %337 = vmatpush.bf16.msra.mxu0 0
    %338 = vmatpush.bf16.msra.mxu0 0
    %339 = vmatpush.bf16.msra.mxu0 0
    %340 = vmatpush.bf16.msra.mxu0 %v327
    %341 = vmatpush.bf16.msra.mxu0 %v326
    %342 = vmatpush.bf16.msra.mxu0 %v325
    %343 = vmatpush.bf16.msra.mxu0 %v324
    %344 = vmatmul.bf16.gmra.mxu0 %v334
    %v345 = vpop.f32.mrf.mxu0
    %v346 = vadd.f32 %v306, %v345
    %v347 = vpop.f32.mrf.mxu0
    %348 = vdwg.mxu0
    %v349 = vmax.f32 %v346, 0.0
    %v350 = vpack.c.bf16 %v349, %v349
    %v351 = vld [vmem:[%s8] sm:$0xff]
    %v352 = vld [vmem:[%s8 + $0x8] sm:$0xff]
    %v353 = vld [vmem:[%s8 + $0x10] sm:$0xff]
    %v354 = vld [vmem:[%s8 + $0x18] sm:$0xff]
    %v355 = vld [vmem:[%s8 + $0x20] sm:$0xff]
    %v356 = vld [vmem:[%s8 + $0x28] sm:$0xff]
    %v357 = vld [vmem:[%s8 + $0x30] sm:$0xff]
    %v358 = vld [vmem:[%s8 + $0x38] sm:$0xff]
    %v359 = vld [vmem:[%s8 + $0x40] sm:$0xff]
    %v360 = vld [vmem:[%s8 + $0x48] sm:$0xff]
    %v361 = vld [vmem:[%s8 + $0x50] sm:$0xff]
    %v362 = vld [vmem:[%s8 + $0x58] sm:$0xff]
    %v363 = vld [vmem:[%s8 + $0x60] sm:$0xff]
    %v364 = vld [vmem:[%s8 + $0x68] sm:$0xff]
    %v365 = vld [vmem:[%s8 + $0x70] sm:$0xff]
    %v366 = vld [vmem:[%s8 + $0x78] sm:$0xff]
    %v367 = vld [vmem:[#allocation14] sm:$0x3]
    %v369 = vperm.slane %v367, 0
    %v370 = vperm.slane %v367, 1
    %v389 = vunpack.c.l.b16 %v351
    %v390 = vunpack.c.h.b16 %v351
    %v391 = vunpack.c.l.b16 %v352
    %v392 = vunpack.c.h.b16 %v352
    %v393 = vunpack.c.l.b16 %v353
    %v394 = vunpack.c.h.b16 %v353
    %v395 = vunpack.c.l.b16 %v354
    %v396 = vunpack.c.h.b16 %v354
    %v397 = vunpack.c.l.b16 %v355
    %v398 = vunpack.c.h.b16 %v355
    %v399 = vunpack.c.l.b16 %v356
    %v400 = vunpack.c.h.b16 %v356
    %v401 = vunpack.c.l.b16 %v357
    %v402 = vunpack.c.h.b16 %v357
    %v403 = vunpack.c.l.b16 %v358
    %v404 = vunpack.c.h.b16 %v358
    %v405 = vunpack.c.l.b16 %v359
    %v406 = vunpack.c.h.b16 %v359
    %v407 = vunpack.c.l.b16 %v360
    %v408 = vunpack.c.h.b16 %v360
    %v409 = vunpack.c.l.b16 %v361
    %v410 = vunpack.c.h.b16 %v361
    %v411 = vunpack.c.l.b16 %v362
    %v412 = vunpack.c.h.b16 %v362
    %v413 = vunpack.c.l.b16 %v363
    %v414 = vunpack.c.h.b16 %v363
    %v415 = vunpack.c.l.b16 %v364
    %v416 = vunpack.c.h.b16 %v364
    %v417 = vunpack.c.l.b16 %v365
    %v418 = vunpack.c.h.b16 %v365
    %v419 = vunpack.c.l.b16 %v366
    %v420 = vunpack.c.h.b16 %v366
    %v421 = vpack.c.b16 %v391, %v389
    %v422 = vpack.c.b16 %v392, %v390
    %v423 = vpack.c.b16 %v395, %v393
    %v424 = vpack.c.b16 %v396, %v394
    %v425 = vpack.c.b16 %v399, %v397
    %v426 = vpack.c.b16 %v400, %v398
    %v427 = vpack.c.b16 %v403, %v401
    %v428 = vpack.c.b16 %v404, %v402
    %v429 = vpack.c.b16 %v407, %v405
    %v430 = vpack.c.b16 %v408, %v406
    %v431 = vpack.c.b16 %v411, %v409
    %v432 = vpack.c.b16 %v412, %v410
    %v433 = vpack.c.b16 %v415, %v413
    %v434 = vpack.c.b16 %v416, %v414
    %v435 = vpack.c.b16 %v419, %v417
    %v436 = vpack.c.b16 %v420, %v418
    %453 = vmatpush.bf16.msra.mxu0 %v435
    %454 = vmatpush.bf16.msra.mxu0 %v433
    %455 = vmatpush.bf16.msra.mxu0 %v431
    %456 = vmatpush.bf16.msra.mxu0 %v429
    %457 = vmatpush.bf16.msra.mxu0 %v427
    %458 = vmatpush.bf16.msra.mxu0 %v425
    %459 = vmatpush.bf16.msra.mxu0 %v423
    %460 = vmatpush.bf16.msra.mxu0 %v421
    %461 = vmatmul.bf16.gmra.mxu0 %v350
    %v462 = vpop.f32.mrf.mxu0
    %v463 = vadd.f32 %v369, %v462
    %v464 = vpop.f32.mrf.mxu0
    %465 = vdwg.mxu0
    %466 = vmatpush.bf16.msra.mxu0 %v436
    %467 = vmatpush.bf16.msra.mxu0 %v434
    %468 = vmatpush.bf16.msra.mxu0 %v432
    %469 = vmatpush.bf16.msra.mxu0 %v430
    %470 = vmatpush.bf16.msra.mxu0 %v428
    %471 = vmatpush.bf16.msra.mxu0 %v426
    %472 = vmatpush.bf16.msra.mxu0 %v424
    %473 = vmatpush.bf16.msra.mxu0 %v422
    %474 = vmatmul.bf16.gmra.mxu0 %v350
    %v475 = vpop.f32.mrf.mxu0
    %v476 = vadd.f32 %v370, %v475
    %v477 = vpop.f32.mrf.mxu0
    %478 = vdwg.mxu0
    %v479 = vmax.f32 %v463, 0.0
    %v480 = vmax.f32 %v476, 0.0
    %v481 = vpack.c.bf16 %v479, %v479
    %v482 = vpack.c.bf16 %v480, %v480
    %v483 = vld [vmem:[%s10] sm:$0xf]
    %v484 = vld [vmem:[%s10 + $0x4] sm:$0xf]
    %v485 = vld [vmem:[%s10 + $0x8] sm:$0xf]
    %v486 = vld [vmem:[%s10 + $0xc] sm:$0xf]
    %v487 = vld [vmem:[%s10 + $0x10] sm:$0xf]
    %v488 = vld [vmem:[%s10 + $0x14] sm:$0xf]
    %v489 = vld [vmem:[%s10 + $0x18] sm:$0xf]
    %v490 = vld [vmem:[%s10 + $0x1c] sm:$0xf]
    %v491 = vld [vmem:[%s10 + $0x20] sm:$0xf]
    %v492 = vld [vmem:[%s10 + $0x24] sm:$0xf]
    %v493 = vld [vmem:[%s10 + $0x28] sm:$0xf]
    %v494 = vld [vmem:[%s10 + $0x2c] sm:$0xf]
    %v495 = vld [vmem:[%s10 + $0x30] sm:$0xf]
    %v496 = vld [vmem:[%s10 + $0x34] sm:$0xf]
    %v497 = vld [vmem:[%s10 + $0x38] sm:$0xf]
    %v498 = vld [vmem:[%s10 + $0x3c] sm:$0xf]
    %v499 = vld [vmem:[%s10 + $0x40] sm:$0xf]
    %v500 = vld [vmem:[%s10 + $0x44] sm:$0xf]
    %v501 = vld [vmem:[%s10 + $0x48] sm:$0xf]
    %v502 = vld [vmem:[%s10 + $0x4c] sm:$0xf]
    %v503 = vld [vmem:[%s10 + $0x50] sm:$0xf]
    %v504 = vld [vmem:[%s10 + $0x54] sm:$0xf]
    %v505 = vld [vmem:[%s10 + $0x58] sm:$0xf]
    %v506 = vld [vmem:[%s10 + $0x5c] sm:$0xf]
    %v507 = vld [vmem:[%s10 + $0x60] sm:$0xf]
    %v508 = vld [vmem:[%s10 + $0x64] sm:$0xf]
    %v509 = vld [vmem:[%s10 + $0x68] sm:$0xf]
    %v510 = vld [vmem:[%s10 + $0x6c] sm:$0xf]
    %v511 = vld [vmem:[%s10 + $0x70] sm:$0xf]
    %v512 = vld [vmem:[%s10 + $0x74] sm:$0xf]
    %v513 = vld [vmem:[%s10 + $0x78] sm:$0xf]
    %v514 = vld [vmem:[%s10 + $0x7c] sm:$0xf]
    %v515 = vld [vmem:[#allocation16] sm:$0x1]
    %v517 = vperm.slane %v515, 0
    %v551 = vunpack.c.l.b16 %v483
    %v552 = vunpack.c.l.b16 %v484
    %v553 = vunpack.c.l.b16 %v485
    %v554 = vunpack.c.l.b16 %v486
    %v555 = vunpack.c.l.b16 %v487
    %v556 = vunpack.c.l.b16 %v488
    %v557 = vunpack.c.l.b16 %v489
    %v558 = vunpack.c.l.b16 %v490
    %v559 = vunpack.c.l.b16 %v491
    %v560 = vunpack.c.l.b16 %v492
    %v561 = vunpack.c.l.b16 %v493
    %v562 = vunpack.c.l.b16 %v494
    %v563 = vunpack.c.l.b16 %v495
    %v564 = vunpack.c.l.b16 %v496
    %v565 = vunpack.c.l.b16 %v497
    %v566 = vunpack.c.l.b16 %v498
    %v567 = vunpack.c.l.b16 %v499
    %v568 = vunpack.c.l.b16 %v500
    %v569 = vunpack.c.l.b16 %v501
    %v570 = vunpack.c.l.b16 %v502
    %v571 = vunpack.c.l.b16 %v503
    %v572 = vunpack.c.l.b16 %v504
    %v573 = vunpack.c.l.b16 %v505
    %v574 = vunpack.c.l.b16 %v506
    %v575 = vunpack.c.l.b16 %v507
    %v576 = vunpack.c.l.b16 %v508
    %v577 = vunpack.c.l.b16 %v509
    %v578 = vunpack.c.l.b16 %v510
    %v579 = vunpack.c.l.b16 %v511
    %v580 = vunpack.c.l.b16 %v512
    %v581 = vunpack.c.l.b16 %v513
    %v582 = vunpack.c.l.b16 %v514
    %v583 = vpack.c.b16 %v552, %v551
    %v584 = vpack.c.b16 %v554, %v553
    %v585 = vpack.c.b16 %v556, %v555
    %v586 = vpack.c.b16 %v558, %v557
    %v587 = vpack.c.b16 %v560, %v559
    %v588 = vpack.c.b16 %v562, %v561
    %v589 = vpack.c.b16 %v564, %v563
    %v590 = vpack.c.b16 %v566, %v565
    %v591 = vpack.c.b16 %v568, %v567
    %v592 = vpack.c.b16 %v570, %v569
    %v593 = vpack.c.b16 %v572, %v571
    %v594 = vpack.c.b16 %v574, %v573
    %v595 = vpack.c.b16 %v576, %v575
    %v596 = vpack.c.b16 %v578, %v577
    %v597 = vpack.c.b16 %v580, %v579
    %v598 = vpack.c.b16 %v582, %v581
    %615 = vmatpush.bf16.msra.mxu0 %v590
    %616 = vmatpush.bf16.msra.mxu0 %v589
    %617 = vmatpush.bf16.msra.mxu0 %v588
    %618 = vmatpush.bf16.msra.mxu0 %v587
    %619 = vmatpush.bf16.msra.mxu0 %v586
    %620 = vmatpush.bf16.msra.mxu0 %v585
    %621 = vmatpush.bf16.msra.mxu0 %v584
    %622 = vmatpush.bf16.msra.mxu0 %v583
    %623 = vmatmul.bf16.gmra.mxu0 %v481
    %v624 = vpop.f32.mrf.mxu0
    %v625 = vadd.f32 %v517, %v624
    %v626 = vpop.f32.mrf.mxu0
    %627 = vdwg.mxu0
    %628 = vmatpush.bf16.msra.mxu0 %v598
    %629 = vmatpush.bf16.msra.mxu0 %v597
    %630 = vmatpush.bf16.msra.mxu0 %v596
    %631 = vmatpush.bf16.msra.mxu0 %v595
    %632 = vmatpush.bf16.msra.mxu0 %v594
    %633 = vmatpush.bf16.msra.mxu0 %v593
    %634 = vmatpush.bf16.msra.mxu0 %v592
    %635 = vmatpush.bf16.msra.mxu0 %v591
    %636 = vmatmul.bf16.gmra.mxu0 %v482
    %v637 = vpop.f32.mrf.mxu0
    %v638 = vadd.f32 %v625, %v637
    %v639 = vpop.f32.mrf.mxu0
    %640 = vdwg.mxu0
    %v641 = vmul.f32 %v638, 0.5
    %v642 = vmul.f32 %v641, 1.442695
    %v643 = vpow.pop %v642
    %v644 = vld [vmem:[#allocation2] sm:$0xff]
    %646 = vrot.lane.b32.xlu0 %v644, 32
    %v647 = vpop.permute.xlu0 %646
    %v649 = vmul.f32 %v643, %v647
    %651 = vrot.lane.b32.xlu0 %v649, 96
    %v652 = vpop.permute.xlu0 %651
    %v654 = vadd.f32 %v638, %v652
    %v655 = vpack.c.bf16 %v654, %v654
    %v656 = vld [vmem:[#allocation17] sm:$0xff]
    %v657 = vld [vmem:[#allocation17 + $0x8] sm:$0xff]
    %v658 = vld [vmem:[#allocation17 + $0x10] sm:$0xff]
    %v659 = vld [vmem:[#allocation17 + $0x18] sm:$0xff]
    %v660 = vld [vmem:[#allocation19] sm:$0x3]
    %v662 = vperm.slane %v660, 0
    %v663 = vperm.slane %v660, 1
    %v670 = vunpack.c.l.b16 %v656
    %v671 = vunpack.c.h.b16 %v656
    %v672 = vunpack.c.l.b16 %v657
    %v673 = vunpack.c.h.b16 %v657
    %v674 = vunpack.c.l.b16 %v658
    %v675 = vunpack.c.h.b16 %v658
    %v676 = vunpack.c.l.b16 %v659
    %v677 = vunpack.c.h.b16 %v659
    %v678 = vpack.c.b16 %v672, %v670
    %v679 = vpack.c.b16 %v673, %v671
    %v680 = vpack.c.b16 %v676, %v674
    %v681 = vpack.c.b16 %v677, %v675
    %v687 = vsel %vm277, %v655, 0
    %689 = vmatpush.bf16.msra.mxu0 0
    %690 = vmatpush.bf16.msra.mxu0 0
    %691 = vmatpush.bf16.msra.mxu0 0
    %692 = vmatpush.bf16.msra.mxu0 0
    %693 = vmatpush.bf16.msra.mxu0 0
    %694 = vmatpush.bf16.msra.mxu0 0
    %695 = vmatpush.bf16.msra.mxu0 %v680
    %696 = vmatpush.bf16.msra.mxu0 %v678
    %697 = vmatmul.bf16.gmra.mxu0 %v687
    %v698 = vpop.f32.mrf.mxu0
    %v699 = vadd.f32 %v662, %v698
    %v700 = vpop.f32.mrf.mxu0
    %701 = vdwg.mxu0
    %702 = vmatpush.bf16.msra.mxu0 0
    %703 = vmatpush.bf16.msra.mxu0 0
    %704 = vmatpush.bf16.msra.mxu0 0
    %705 = vmatpush.bf16.msra.mxu0 0
    %706 = vmatpush.bf16.msra.mxu0 0
    %707 = vmatpush.bf16.msra.mxu0 0
    %708 = vmatpush.bf16.msra.mxu0 %v681
    %709 = vmatpush.bf16.msra.mxu0 %v679
    %710 = vmatmul.bf16.gmra.mxu0 %v687
    %v711 = vpop.f32.mrf.mxu0
    %v712 = vadd.f32 %v663, %v711
    %v713 = vpop.f32.mrf.mxu0
    %714 = vdwg.mxu0
    %v715 = vpack.c.bf16 %v699, %v699
    %v716 = vpack.c.bf16 %v712, %v712
    %v717 = vld [vmem:[%s14] sm:$0xf]
    %v718 = vld [vmem:[%s14 + $0x4] sm:$0xf]
    %v719 = vld [vmem:[%s14 + $0x8] sm:$0xf]
    %v720 = vld [vmem:[%s14 + $0xc] sm:$0xf]
    %v721 = vld [vmem:[%s14 + $0x10] sm:$0xf]
    %v722 = vld [vmem:[%s14 + $0x14] sm:$0xf]
    %v723 = vld [vmem:[%s14 + $0x18] sm:$0xf]
    %v724 = vld [vmem:[%s14 + $0x1c] sm:$0xf]
    %v725 = vld [vmem:[%s14 + $0x20] sm:$0xf]
    %v726 = vld [vmem:[%s14 + $0x24] sm:$0xf]
    %v727 = vld [vmem:[%s14 + $0x28] sm:$0xf]
    %v728 = vld [vmem:[%s14 + $0x2c] sm:$0xf]
    %v729 = vld [vmem:[%s14 + $0x30] sm:$0xf]
    %v730 = vld [vmem:[%s14 + $0x34] sm:$0xf]
    %v731 = vld [vmem:[%s14 + $0x38] sm:$0xf]
    %v732 = vld [vmem:[%s14 + $0x3c] sm:$0xf]
    %v733 = vld [vmem:[%s14 + $0x40] sm:$0xf]
    %v734 = vld [vmem:[%s14 + $0x44] sm:$0xf]
    %v735 = vld [vmem:[%s14 + $0x48] sm:$0xf]
    %v736 = vld [vmem:[%s14 + $0x4c] sm:$0xf]
    %v737 = vld [vmem:[%s14 + $0x50] sm:$0xf]
    %v738 = vld [vmem:[%s14 + $0x54] sm:$0xf]
    %v739 = vld [vmem:[%s14 + $0x58] sm:$0xf]
    %v740 = vld [vmem:[%s14 + $0x5c] sm:$0xf]
    %v741 = vld [vmem:[%s14 + $0x60] sm:$0xf]
    %v742 = vld [vmem:[%s14 + $0x64] sm:$0xf]
    %v743 = vld [vmem:[%s14 + $0x68] sm:$0xf]
    %v744 = vld [vmem:[%s14 + $0x6c] sm:$0xf]
    %v745 = vld [vmem:[%s14 + $0x70] sm:$0xf]
    %v746 = vld [vmem:[%s14 + $0x74] sm:$0xf]
    %v747 = vld [vmem:[%s14 + $0x78] sm:$0xf]
    %v748 = vld [vmem:[%s14 + $0x7c] sm:$0xf]
    %v749 = vld [vmem:[%s15] sm:$0x1]
    %v751 = vperm.slane %v749, 0
    %v785 = vunpack.c.l.b16 %v717
    %v786 = vunpack.c.l.b16 %v718
    %v787 = vunpack.c.l.b16 %v719
    %v788 = vunpack.c.l.b16 %v720
    %v789 = vunpack.c.l.b16 %v721
    %v790 = vunpack.c.l.b16 %v722
    %v791 = vunpack.c.l.b16 %v723
    %v792 = vunpack.c.l.b16 %v724
    %v793 = vunpack.c.l.b16 %v725
    %v794 = vunpack.c.l.b16 %v726
    %v795 = vunpack.c.l.b16 %v727
    %v796 = vunpack.c.l.b16 %v728
    %v797 = vunpack.c.l.b16 %v729
    %v798 = vunpack.c.l.b16 %v730
    %v799 = vunpack.c.l.b16 %v731
    %v800 = vunpack.c.l.b16 %v732
    %v801 = vunpack.c.l.b16 %v733
    %v802 = vunpack.c.l.b16 %v734
    %v803 = vunpack.c.l.b16 %v735
    %v804 = vunpack.c.l.b16 %v736
    %v805 = vunpack.c.l.b16 %v737
    %v806 = vunpack.c.l.b16 %v738
    %v807 = vunpack.c.l.b16 %v739
    %v808 = vunpack.c.l.b16 %v740
    %v809 = vunpack.c.l.b16 %v741
    %v810 = vunpack.c.l.b16 %v742
    %v811 = vunpack.c.l.b16 %v743
    %v812 = vunpack.c.l.b16 %v744
    %v813 = vunpack.c.l.b16 %v745
    %v814 = vunpack.c.l.b16 %v746
    %v815 = vunpack.c.l.b16 %v747
    %v816 = vunpack.c.l.b16 %v748
    %v817 = vpack.c.b16 %v786, %v785
    %v818 = vpack.c.b16 %v788, %v787
    %v819 = vpack.c.b16 %v790, %v789
    %v820 = vpack.c.b16 %v792, %v791
    %v821 = vpack.c.b16 %v794, %v793
    %v822 = vpack.c.b16 %v796, %v795
    %v823 = vpack.c.b16 %v798, %v797
    %v824 = vpack.c.b16 %v800, %v799
    %v825 = vpack.c.b16 %v802, %v801
    %v826 = vpack.c.b16 %v804, %v803
    %v827 = vpack.c.b16 %v806, %v805
    %v828 = vpack.c.b16 %v808, %v807
    %v829 = vpack.c.b16 %v810, %v809
    %v830 = vpack.c.b16 %v812, %v811
    %v831 = vpack.c.b16 %v814, %v813
    %v832 = vpack.c.b16 %v816, %v815
    %849 = vmatpush.bf16.msra.mxu0 %v824
    %850 = vmatpush.bf16.msra.mxu0 %v823
    %851 = vmatpush.bf16.msra.mxu0 %v822
    %852 = vmatpush.bf16.msra.mxu0 %v821
    %853 = vmatpush.bf16.msra.mxu0 %v820
    %854 = vmatpush.bf16.msra.mxu0 %v819
    %855 = vmatpush.bf16.msra.mxu0 %v818
    %856 = vmatpush.bf16.msra.mxu0 %v817
    %857 = vmatmul.bf16.gmra.mxu0 %v715
    %v858 = vpop.f32.mrf.mxu0
    %v859 = vadd.f32 %v751, %v858
    %v860 = vpop.f32.mrf.mxu0
    %861 = vdwg.mxu0
    %862 = vmatpush.bf16.msra.mxu0 %v832
    %863 = vmatpush.bf16.msra.mxu0 %v831
    %864 = vmatpush.bf16.msra.mxu0 %v830
    %865 = vmatpush.bf16.msra.mxu0 %v829
    %866 = vmatpush.bf16.msra.mxu0 %v828
    %867 = vmatpush.bf16.msra.mxu0 %v827
    %868 = vmatpush.bf16.msra.mxu0 %v826
    %869 = vmatpush.bf16.msra.mxu0 %v825
    %870 = vmatmul.bf16.gmra.mxu0 %v716
    %v871 = vpop.f32.mrf.mxu0
    %v872 = vadd.f32 %v859, %v871
    %v873 = vpop.f32.mrf.mxu0
    %874 = vdwg.mxu0
    %v875 = vmax.f32 %v872, 0.0
    %v876 = vpack.c.bf16 %v875, %v875
    %v877 = vld [vmem:[%s16] sm:$0xf]
    %v878 = vld [vmem:[%s16 + $0x4] sm:$0xf]
    %v879 = vld [vmem:[%s16 + $0x8] sm:$0xf]
    %v880 = vld [vmem:[%s16 + $0xc] sm:$0xf]
    %v881 = vld [vmem:[%s16 + $0x10] sm:$0xf]
    %v882 = vld [vmem:[%s16 + $0x14] sm:$0xf]
    %v883 = vld [vmem:[%s16 + $0x18] sm:$0xf]
    %v884 = vld [vmem:[%s16 + $0x1c] sm:$0xf]
    %v885 = vld [vmem:[%s16 + $0x20] sm:$0xf]
    %v886 = vld [vmem:[%s16 + $0x24] sm:$0xf]
    %v887 = vld [vmem:[%s16 + $0x28] sm:$0xf]
    %v888 = vld [vmem:[%s16 + $0x2c] sm:$0xf]
    %v889 = vld [vmem:[%s16 + $0x30] sm:$0xf]
    %v890 = vld [vmem:[%s16 + $0x34] sm:$0xf]
    %v891 = vld [vmem:[%s16 + $0x38] sm:$0xf]
    %v892 = vld [vmem:[%s16 + $0x3c] sm:$0xf]
    %v893 = vld [vmem:[%s17] sm:$0x1]
    %v895 = vperm.slane %v893, 0
    %v913 = vunpack.c.l.b16 %v877
    %v914 = vunpack.c.l.b16 %v878
    %v915 = vunpack.c.l.b16 %v879
    %v916 = vunpack.c.l.b16 %v880
    %v917 = vunpack.c.l.b16 %v881
    %v918 = vunpack.c.l.b16 %v882
    %v919 = vunpack.c.l.b16 %v883
    %v920 = vunpack.c.l.b16 %v884
    %v921 = vunpack.c.l.b16 %v885
    %v922 = vunpack.c.l.b16 %v886
    %v923 = vunpack.c.l.b16 %v887
    %v924 = vunpack.c.l.b16 %v888
    %v925 = vunpack.c.l.b16 %v889
    %v926 = vunpack.c.l.b16 %v890
    %v927 = vunpack.c.l.b16 %v891
    %v928 = vunpack.c.l.b16 %v892
    %v929 = vpack.c.b16 %v914, %v913
    %v930 = vpack.c.b16 %v916, %v915
    %v931 = vpack.c.b16 %v918, %v917
    %v932 = vpack.c.b16 %v920, %v919
    %v933 = vpack.c.b16 %v922, %v921
    %v934 = vpack.c.b16 %v924, %v923
    %v935 = vpack.c.b16 %v926, %v925
    %v936 = vpack.c.b16 %v928, %v927
    %945 = vmatpush.bf16.msra.mxu0 %v936
    %946 = vmatpush.bf16.msra.mxu0 %v935
    %947 = vmatpush.bf16.msra.mxu0 %v934
    %948 = vmatpush.bf16.msra.mxu0 %v933
    %949 = vmatpush.bf16.msra.mxu0 %v932
    %950 = vmatpush.bf16.msra.mxu0 %v931
    %951 = vmatpush.bf16.msra.mxu0 %v930
    %952 = vmatpush.bf16.msra.mxu0 %v929
    %953 = vmatmul.bf16.gmra.mxu0 %v876
    %v954 = vpop.f32.mrf.mxu0
    %v955 = vadd.f32 %v895, %v954
    %v956 = vpop.f32.mrf.mxu0
    %957 = vdwg.mxu0
    %v958 = vmax.f32 %v955, 0.0
    %v959 = vpack.c.bf16 %v958, %v958
    %v960 = vld [vmem:[%s18] sm:$0xf]
    %v961 = vld [vmem:[%s18 + $0x4] sm:$0xf]
    %v962 = vld [vmem:[%s18 + $0x8] sm:$0xf]
    %v963 = vld [vmem:[%s18 + $0xc] sm:$0xf]
    %v964 = vld [vmem:[%s18 + $0x10] sm:$0xf]
    %v965 = vld [vmem:[%s18 + $0x14] sm:$0xf]
    %v966 = vld [vmem:[%s18 + $0x18] sm:$0xf]
    %v967 = vld [vmem:[%s18 + $0x1c] sm:$0xf]
    %v968 = vld [vmem:[%s19] sm:$0x1]
    %v970 = vperm.slane %v968, 0
    %v980 = vunpack.c.l.b16 %v960
    %v981 = vunpack.c.l.b16 %v961
    %v982 = vunpack.c.l.b16 %v962
    %v983 = vunpack.c.l.b16 %v963
    %v984 = vunpack.c.l.b16 %v964
    %v985 = vunpack.c.l.b16 %v965
    %v986 = vunpack.c.l.b16 %v966
    %v987 = vunpack.c.l.b16 %v967
    %v988 = vpack.c.b16 %v981, %v980
    %v989 = vpack.c.b16 %v983, %v982
    %v990 = vpack.c.b16 %v985, %v984
    %v991 = vpack.c.b16 %v987, %v986
    %v997 = vsel %vm332, %v959, 0
    %999 = vmatpush.bf16.msra.mxu0 0
    %1000 = vmatpush.bf16.msra.mxu0 0
    %1001 = vmatpush.bf16.msra.mxu0 0
    %1002 = vmatpush.bf16.msra.mxu0 0
    %1003 = vmatpush.bf16.msra.mxu0 %v991
    %1004 = vmatpush.bf16.msra.mxu0 %v990
    %1005 = vmatpush.bf16.msra.mxu0 %v989
    %1006 = vmatpush.bf16.msra.mxu0 %v988
    %1007 = vmatmul.bf16.gmra.mxu0 %v997
    %v1008 = vpop.f32.mrf.mxu0
    %v1009 = vadd.f32 %v970, %v1008
    %v1010 = vpop.f32.mrf.mxu0
    %1011 = vdwg.mxu0
    %v1012 = vmax.f32 %v1009, 0.0
    %v1013 = vpack.c.bf16 %v1012, %v1012
    %v1014 = vld [vmem:[%s20] sm:$0xf]
    %v1015 = vld [vmem:[%s20 + $0x4] sm:$0xf]
    %v1016 = vld [vmem:[%s20 + $0x8] sm:$0xf]
    %v1017 = vld [vmem:[%s20 + $0xc] sm:$0xf]
    %v1018 = vld [vmem:[%s21] sm:$0x1]
    %v1020 = vperm.slane %v1018, 0
    %v1026 = vunpack.c.l.b16 %v1014
    %v1027 = vunpack.c.l.b16 %v1015
    %v1028 = vunpack.c.l.b16 %v1016
    %v1029 = vunpack.c.l.b16 %v1017
    %v1030 = vpack.c.b16 %v1027, %v1026
    %v1031 = vpack.c.b16 %v1029, %v1028
    %v1035 = vsel %vm277, %v1013, 0
    %1037 = vmatpush.bf16.msra.mxu0 0
    %1038 = vmatpush.bf16.msra.mxu0 0
    %1039 = vmatpush.bf16.msra.mxu0 0
    %1040 = vmatpush.bf16.msra.mxu0 0
    %1041 = vmatpush.bf16.msra.mxu0 0
    %1042 = vmatpush.bf16.msra.mxu0 0
    %1043 = vmatpush.bf16.msra.mxu0 %v1031
    %1044 = vmatpush.bf16.msra.mxu0 %v1030
    %1045 = vmatmul.bf16.gmra.mxu0 %v1035
    %v1046 = vpop.f32.mrf.mxu0
    %v1047 = vadd.f32 %v1020, %v1046
    %v1048 = vpop.f32.mrf.mxu0
    %1049 = vdwg.mxu0
    %v1050 = vsub.f32 0.0, %v1047
    %v1051 = vmul.f32 %v1050, 1.442695
    %v1052 = vpow.pop %v1051
    %v1053 = vadd.f32 %v1052, 1.0
    %v1054 = vrcp.pop %v1053
    %1055 = vst.msk [vmem:[#allocation20] sm:$0xff] %vm332, %v638
    %1057 = vrot.lane.b32.xlu0 %v1054, 64
    %v1058 = vpop.permute.xlu0 %1057
    %vm1060 = vcmask 540160
    %1061 = vst.msk [vmem:[#allocation20] sm:$0xff] %vm1060, %v1058
    %vm1062 = vcmask 1048080
    %1063 = vst.msk [vmem:[#allocation20] sm:$0xff] %vm1062, 0.0
    // Predicated region
    $region134: #{tpu_custom_call.1} parent=1 // pred_check
      _
    $region135: #{tpu_custom_call.1} parent=1 // pred_check_branch
      %1065 = sbr.rel (0) target = $region137
    $region136: #{tpu_custom_call.1} parent=1 // pred_region
      %1067 = vsyncadd [#allocation4], 0
      %s1069 = sshll.u32 [#allocation20], 4
      %s1070 = int_to_ptr.vmem [resolvable:$true] %s1069
      %s1071 = sshll.u32 %s22, 4
      %s1072 = int_to_ptr.hbm [resolvable:$true] %s1071
      %1074 = dma.vmem_to_hbm [thread:$0]  %s1070, 128, %s1072, [#allocation4]
    $region137: #{tpu_custom_call.1} parent=1 // pred_fallthru
      _
    // Predicated region
    $region138: #{tpu_custom_call.1} parent=1 // pred_check
      _
    $region139: #{tpu_custom_call.1} parent=1 // pred_check_branch
      %1076 = sbr.rel (0) target = $region141
    $region140: #{tpu_custom_call.1} parent=1 // pred_region
      %1078 = dma.done [#allocation4], 128
    $region141: #{tpu_custom_call.1} parent=1 // pred_fallthru
      _
    %1079 = vsyncpa [#allocation3], 1
    %1080 = vsyncpa [#allocation6], 1
    %1081 = vsyncpa [#allocation9], 1
    %1082 = vsyncpa [#allocation12], 1
    %1083 = vsyncpa [#allocation15], 1
    %1084 = vsyncpa [#allocation18], 1
    %1085 = vsyncpa [#allocation4], 1

// kernel: tpu_custom_call.1
$region0: #{tpu_custom_call.1}
  #allocation0 [shape = 'u32[]', space=smem, size = 0x4, offset = 0x4, fixed_abs, tag = 'smem constant byte address 0x4 - core index']
  #allocation1 [shape = 'u32[72,128]{1,0:T(1,128)}', space=vmem, size = 0x9000, scoped, tag = 'internal scratch']
  %s0 = inlined_call_operand.vmem [shape: bf16[8,2], index: 0, kind: input, shape index: {}]
  %s1 = inlined_call_operand.hbm [shape: f32[8,32], index: 1, kind: input, shape index: {}]
  %s2 = inlined_call_operand.hbm [shape: bf16[2,32], index: 2, kind: input, shape index: {}]
  %s3 = inlined_call_operand.hbm [shape: f32[1,32], index: 3, kind: input, shape index: {}]
  %s4 = inlined_call_operand.hbm [shape: bf16[32,64], index: 4, kind: input, shape index: {}]
  %s5 = inlined_call_operand.hbm [shape: f32[1,64], index: 5, kind: input, shape index: {}]
  %s6 = inlined_call_operand.hbm [shape: bf16[64,128], index: 6, kind: input, shape index: {}]
  %s7 = inlined_call_operand.hbm [shape: f32[1,128], index: 7, kind: input, shape index: {}]
  %s8 = inlined_call_operand.vmem [shape: bf16[128,256], index: 8, kind: input, shape index: {}]
  %s9 = inlined_call_operand.hbm [shape: f32[1,256], index: 9, kind: input, shape index: {}]
  %s10 = inlined_call_operand.vmem [shape: bf16[256,64], index: 10, kind: input, shape index: {}]
  %s11 = inlined_call_operand.hbm [shape: f32[1,64], index: 11, kind: input, shape index: {}]
  %s12 = inlined_call_operand.hbm [shape: bf16[32,256], index: 12, kind: input, shape index: {}]
  %s13 = inlined_call_operand.hbm [shape: f32[1,256], index: 13, kind: input, shape index: {}]
  %s14 = inlined_call_operand.vmem [shape: bf16[256,128], index: 14, kind: input, shape index: {}]
  %s15 = inlined_call_operand.vmem [shape: f32[1,128], index: 15, kind: input, shape index: {}]
  %s16 = inlined_call_operand.vmem [shape: bf16[128,64], index: 16, kind: input, shape index: {}]
  %s17 = inlined_call_operand.vmem [shape: f32[1,64], index: 17, kind: input, shape index: {}]
  %s18 = inlined_call_operand.vmem [shape: bf16[64,32], index: 18, kind: input, shape index: {}]
  %s19 = inlined_call_operand.vmem [shape: f32[1,32], index: 19, kind: input, shape index: {}]
  %s20 = inlined_call_operand.vmem [shape: bf16[32,2], index: 20, kind: input, shape index: {}]
  %s21 = inlined_call_operand.vmem [shape: f32[1,2], index: 21, kind: input, shape index: {}]
  %s22 = inlined_call_operand.hbm [shape: f32[8,128], index: 22, kind: output, shape index: {}]
  %s23 = sld [smem:[#allocation0]]
  $region142: #{tpu_custom_call.1} parent=0
    _
  %s25 = ssub.s32 1, %s23
  %s26 = scalar_select 0, %s25, %s23
  $region1: #{tpu_custom_call.1} parent=0
    #allocation2 [shape = 'u8[4096]{0}', space=vmem, size = 0x1000, scoped, tag = 'input window, operand 1, single buffered']
    #allocation3 [shape = 's32[1]{0}', space=sflag, size = 0x4, scoped, tag = 'scoped memory for tpu_custom_call.1']
    #allocation4 [shape = 's32[1]{0}', space=sflag, size = 0x4, scoped, tag = 'scoped memory for tpu_custom_call.1']
    #allocation5 [shape = 'u8[512]{0}', space=vmem, size = 0x400, scoped, tag = 'input window, operand 2, single buffered']
    #allocation6 [shape = 's32[1]{0}', space=sflag, size = 0x4, scoped, tag = 'scoped memory for tpu_custom_call.1']
    #allocation7 [shape = 'u8[512]{0}', space=vmem, size = 0x400, scoped, tag = 'input window, operand 3, single buffered']
    #allocation8 [shape = 'u8[8192]{0}', space=vmem, size = 0x2000, scoped, tag = 'input window, operand 4, single buffered']
    #allocation9 [shape = 's32[1]{0}', space=sflag, size = 0x4, scoped, tag = 'scoped memory for tpu_custom_call.1']
    #allocation10 [shape = 'u8[512]{0}', space=vmem, size = 0x400, scoped, tag = 'input window, operand 5, single buffered']
    #allocation11 [shape = 'u8[16384]{0}', space=vmem, size = 0x4000, scoped, tag = 'input window, operand 6, single buffered']
    #allocation12 [shape = 's32[1]{0}', space=sflag, size = 0x4, scoped, tag = 'scoped memory for tpu_custom_call.1']
    #allocation13 [shape = 'u8[512]{0}', space=vmem, size = 0x400, scoped, tag = 'input window, operand 7, single buffered']
    #allocation14 [shape = 'u8[1024]{0}', space=vmem, size = 0x400, scoped, tag = 'input window, operand 9, single buffered']
    #allocation15 [shape = 's32[1]{0}', space=sflag, size = 0x4, scoped, tag = 'scoped memory for tpu_custom_call.1']
    #allocation16 [shape = 'u8[512]{0}', space=vmem, size = 0x400, scoped, tag = 'input window, operand 11, single buffered']
    #allocation17 [shape = 'u8[16384]{0}', space=vmem, size = 0x4000, scoped, tag = 'input window, operand 12, single buffered']
    #allocation18 [shape = 's32[1]{0}', space=sflag, size = 0x4, scoped, tag = 'scoped memory for tpu_custom_call.1']
    #allocation19 [shape = 'u8[1024]{0}', space=vmem, size = 0x400, scoped, tag = 'input window, operand 13, single buffered']
    #allocation20 [shape = 'u8[4096]{0}', space=vmem, size = 0x1000, scoped, tag = 'output window, operand 0, single buffered']
    %27 = vsyncpa [#allocation3], 0
    %28 = vsyncpa [#allocation6], 0
    %29 = vsyncpa [#allocation9], 0
    %30 = vsyncpa [#allocation12], 0
    %31 = vsyncpa [#allocation15], 0
    %32 = vsyncpa [#allocation18], 0
    %33 = vsyncpa [#allocation4], 0
    // Predicated region
    $region2: #{tpu_custom_call.1} parent=1 // pred_check
      _
    $region3: #{tpu_custom_call.1} parent=1 // pred_check_branch
      %35 = sbr.rel (0) target = $region5
    $region4: #{tpu_custom_call.1} parent=1 // pred_region
      _
    $region5: #{tpu_custom_call.1} parent=1 // pred_fallthru
      _
    // Predicated region
    $region6: #{tpu_custom_call.1} parent=1 // pred_check
      _
    $region7: #{tpu_custom_call.1} parent=1 // pred_check_branch
      %37 = sbr.rel (0) target = $region9
    $region8: #{tpu_custom_call.1} parent=1 // pred_region
      %39 = vsyncadd [#allocation3], 0
      %s41 = sshll.u32 %s1, 4
      %s42 = int_to_ptr.hbm [resolvable:$true] %s41
      %s43 = sshll.u32 [#allocation2], 4
      %s44 = int_to_ptr.vmem [resolvable:$true] %s43
      %46 = dma.hbm_to_vmem [thread:$0]  %s42, 128, %s44, [#allocation3]
    $region9: #{tpu_custom_call.1} parent=1 // pred_fallthru
      _
    // Predicated region
    $region10: #{tpu_custom_call.1} parent=1 // pred_check
      _
    $region11: #{tpu_custom_call.1} parent=1 // pred_check_branch
      %48 = sbr.rel (0) target = $region13
    $region12: #{tpu_custom_call.1} parent=1 // pred_region
      %50 = vsyncadd [#allocation6], 0
      %s52 = sshll.u32 %s2, 4
      %s53 = int_to_ptr.hbm [resolvable:$true] %s52
      %s54 = sshll.u32 [#allocation5], 4
      %s55 = int_to_ptr.vmem [resolvable:$true] %s54
      %57 = dma.hbm_to_vmem [thread:$0]  %s53, 16, %s55, [#allocation6]
    $region13: #{tpu_custom_call.1} parent=1 // pred_fallthru
      _
    // Predicated region
    $region14: #{tpu_custom_call.1} parent=1 // pred_check
      _
    $region15: #{tpu_custom_call.1} parent=1 // pred_check_branch
      %59 = sbr.rel (0) target = $region17
    $region16: #{tpu_custom_call.1} parent=1 // pred_region
      %61 = vsyncadd [#allocation6], 0
      %s63 = sshll.u32 %s3, 4
      %s64 = int_to_ptr.hbm [resolvable:$true] %s63
      %s65 = sshll.u32 [#allocation7], 4
      %s66 = int_to_ptr.vmem [resolvable:$true] %s65
      %68 = dma.hbm_to_vmem [thread:$0]  %s64, 16, %s66, [#allocation6]
    $region17: #{tpu_custom_call.1} parent=1 // pred_fallthru
      _
    // Predicated region
    $region18: #{tpu_custom_call.1} parent=1 // pred_check
      _
    $region19: #{tpu_custom_call.1} parent=1 // pred_check_branch
      %70 = sbr.rel (0) target = $region21
    $region20: #{tpu_custom_call.1} parent=1 // pred_region
      %72 = vsyncadd [#allocation9], 0
      %s73 = sshll.u32 %s4, 4
      %s74 = int_to_ptr.hbm [resolvable:$true] %s73
      %s75 = sshll.u32 [#allocation8], 4
      %s76 = int_to_ptr.vmem [resolvable:$true] %s75
      %81 = dma.hbm_to_vmem [thread:$0]  %s74, 256, %s76, [#allocation9], 64, 64, 4
    $region21: #{tpu_custom_call.1} parent=1 // pred_fallthru
      _
    // Predicated region
    $region22: #{tpu_custom_call.1} parent=1 // pred_check
      _
    $region23: #{tpu_custom_call.1} parent=1 // pred_check_branch
      %83 = sbr.rel (0) target = $region25
    $region24: #{tpu_custom_call.1} parent=1 // pred_region
      %85 = vsyncadd [#allocation9], 0
      %s87 = sshll.u32 %s5, 4
      %s88 = int_to_ptr.hbm [resolvable:$true] %s87
      %s89 = sshll.u32 [#allocation10], 4
      %s90 = int_to_ptr.vmem [resolvable:$true] %s89
      %92 = dma.hbm_to_vmem [thread:$0]  %s88, 16, %s90, [#allocation9]
    $region25: #{tpu_custom_call.1} parent=1 // pred_fallthru
      _
    // Predicated region
    $region26: #{tpu_custom_call.1} parent=1 // pred_check
      _
    $region27: #{tpu_custom_call.1} parent=1 // pred_check_branch
      %94 = sbr.rel (0) target = $region29
    $region28: #{tpu_custom_call.1} parent=1 // pred_region
      %96 = vsyncadd [#allocation12], 0
      %s97 = sshll.u32 %s6, 4
      %s98 = int_to_ptr.hbm [resolvable:$true] %s97
      %s99 = sshll.u32 [#allocation11], 4
      %s100 = int_to_ptr.vmem [resolvable:$true] %s99
      %105 = dma.hbm_to_vmem [thread:$0]  %s98, 512, %s100, [#allocation12], 64, 64, 4
    $region29: #{tpu_custom_call.1} parent=1 // pred_fallthru
      _
    // Predicated region
    $region30: #{tpu_custom_call.1} parent=1 // pred_check
      _
    $region31: #{tpu_custom_call.1} parent=1 // pred_check_branch
      %107 = sbr.rel (0) target = $region33
    $region32: #{tpu_custom_call.1} parent=1 // pred_region
      %109 = vsyncadd [#allocation12], 0
      %s111 = sshll.u32 %s7, 4
      %s112 = int_to_ptr.hbm [resolvable:$true] %s111
      %s113 = sshll.u32 [#allocation13], 4
      %s114 = int_to_ptr.vmem [resolvable:$true] %s113
      %116 = dma.hbm_to_vmem [thread:$0]  %s112, 16, %s114, [#allocation12]
    $region33: #{tpu_custom_call.1} parent=1 // pred_fallthru
      _
    // Predicated region
    $region34: #{tpu_custom_call.1} parent=1 // pred_check
      _
    $region35: #{tpu_custom_call.1} parent=1 // pred_check_branch
      %118 = sbr.rel (0) target = $region37
    $region36: #{tpu_custom_call.1} parent=1 // pred_region
      _
    $region37: #{tpu_custom_call.1} parent=1 // pred_fallthru
      _
    // Predicated region
    $region38: #{tpu_custom_call.1} parent=1 // pred_check
      _
    $region39: #{tpu_custom_call.1} parent=1 // pred_check_branch
      %120 = sbr.rel (0) target = $region41
    $region40: #{tpu_custom_call.1} parent=1 // pred_region
      %122 = vsyncadd [#allocation15], 0
      %s124 = sshll.u32 %s9, 4
      %s125 = int_to_ptr.hbm [resolvable:$true] %s124
      %s126 = sshll.u32 [#allocation14], 4
      %s127 = int_to_ptr.vmem [resolvable:$true] %s126
      %129 = dma.hbm_to_vmem [thread:$0]  %s125, 32, %s127, [#allocation15]
    $region41: #{tpu_custom_call.1} parent=1 // pred_fallthru
      _
    // Predicated region
    $region42: #{tpu_custom_call.1} parent=1 // pred_check
      _
    $region43: #{tpu_custom_call.1} parent=1 // pred_check_branch
      %131 = sbr.rel (0) target = $region45
    $region44: #{tpu_custom_call.1} parent=1 // pred_region
      _
    $region45: #{tpu_custom_call.1} parent=1 // pred_fallthru
      _
    // Predicated region
    $region46: #{tpu_custom_call.1} parent=1 // pred_check
      _
    $region47: #{tpu_custom_call.1} parent=1 // pred_check_branch
      %133 = sbr.rel (0) target = $region49
    $region48: #{tpu_custom_call.1} parent=1 // pred_region
      %135 = vsyncadd [#allocation15], 0
      %s137 = sshll.u32 %s11, 4
      %s138 = int_to_ptr.hbm [resolvable:$true] %s137
      %s139 = sshll.u32 [#allocation16], 4
      %s140 = int_to_ptr.vmem [resolvable:$true] %s139
      %142 = dma.hbm_to_vmem [thread:$0]  %s138, 16, %s140, [#allocation15]
    $region49: #{tpu_custom_call.1} parent=1 // pred_fallthru
      _
    // Predicated region
    $region50: #{tpu_custom_call.1} parent=1 // pred_check
      _
    $region51: #{tpu_custom_call.1} parent=1 // pred_check_branch
      %144 = sbr.rel (0) target = $region53
    $region52: #{tpu_custom_call.1} parent=1 // pred_region
      %146 = vsyncadd [#allocation18], 0
      %s147 = sshll.u32 %s12, 4
      %s148 = int_to_ptr.hbm [resolvable:$true] %s147
      %s149 = sshll.u32 [#allocation17], 4
      %s150 = int_to_ptr.vmem [resolvable:$true] %s149
      %155 = dma.hbm_to_vmem [thread:$0]  %s148, 512, %s150, [#allocation18], 128, 128, 8
    $region53: #{tpu_custom_call.1} parent=1 // pred_fallthru
      _
    // Predicated region
    $region54: #{tpu_custom_call.1} parent=1 // pred_check
      _
    $region55: #{tpu_custom_call.1} parent=1 // pred_check_branch
      %157 = sbr.rel (0) target = $region57
    $region56: #{tpu_custom_call.1} parent=1 // pred_region
      %159 = vsyncadd [#allocation18], 0
      %s161 = sshll.u32 %s13, 4
      %s162 = int_to_ptr.hbm [resolvable:$true] %s161
      %s163 = sshll.u32 [#allocation19], 4
      %s164 = int_to_ptr.vmem [resolvable:$true] %s163
      %166 = dma.hbm_to_vmem [thread:$0]  %s162, 32, %s164, [#allocation18]
    $region57: #{tpu_custom_call.1} parent=1 // pred_fallthru
      _
    // Predicated region
    $region58: #{tpu_custom_call.1} parent=1 // pred_check
      _
    $region59: #{tpu_custom_call.1} parent=1 // pred_check_branch
      %168 = sbr.rel (0) target = $region61
    $region60: #{tpu_custom_call.1} parent=1 // pred_region
      _
    $region61: #{tpu_custom_call.1} parent=1 // pred_fallthru
      _
    // Predicated region
    $region62: #{tpu_custom_call.1} parent=1 // pred_check
      _
    $region63: #{tpu_custom_call.1} parent=1 // pred_check_branch
      %170 = sbr.rel (0) target = $region65
    $region64: #{tpu_custom_call.1} parent=1 // pred_region
      _
    $region65: #{tpu_custom_call.1} parent=1 // pred_fallthru
      _
    // Predicated region
    $region66: #{tpu_custom_call.1} parent=1 // pred_check
      _
    $region67: #{tpu_custom_call.1} parent=1 // pred_check_branch
      %172 = sbr.rel (0) target = $region69
    $region68: #{tpu_custom_call.1} parent=1 // pred_region
      _
    $region69: #{tpu_custom_call.1} parent=1 // pred_fallthru
      _
    // Predicated region
    $region70: #{tpu_custom_call.1} parent=1 // pred_check
      _
    $region71: #{tpu_custom_call.1} parent=1 // pred_check_branch
      %174 = sbr.rel (0) target = $region73
    $region72: #{tpu_custom_call.1} parent=1 // pred_region
      _
    $region73: #{tpu_custom_call.1} parent=1 // pred_fallthru
      _
    // Predicated region
    $region74: #{tpu_custom_call.1} parent=1 // pred_check
      _
    $region75: #{tpu_custom_call.1} parent=1 // pred_check_branch
      %176 = sbr.rel (0) target = $region77
    $region76: #{tpu_custom_call.1} parent=1 // pred_region
      _
    $region77: #{tpu_custom_call.1} parent=1 // pred_fallthru
      _
    // Predicated region
    $region78: #{tpu_custom_call.1} parent=1 // pred_check
      _
    $region79: #{tpu_custom_call.1} parent=1 // pred_check_branch
      %178 = sbr.rel (0) target = $region81
    $region80: #{tpu_custom_call.1} parent=1 // pred_region
      _
    $region81: #{tpu_custom_call.1} parent=1 // pred_fallthru
      _
    // Predicated region
    $region82: #{tpu_custom_call.1} parent=1 // pred_check
      _
    $region83: #{tpu_custom_call.1} parent=1 // pred_check_branch
      %180 = sbr.rel (0) target = $region85
    $region84: #{tpu_custom_call.1} parent=1 // pred_region
      _
    $region85: #{tpu_custom_call.1} parent=1 // pred_fallthru
      _
    // Predicated region
    $region86: #{tpu_custom_call.1} parent=1 // pred_check
      _
    $region87: #{tpu_custom_call.1} parent=1 // pred_check_branch
      %182 = sbr.rel (0) target = $region89
    $region88: #{tpu_custom_call.1} parent=1 // pred_region
      _
    $region89: #{tpu_custom_call.1} parent=1 // pred_fallthru
      _
    // Predicated region
    $region90: #{tpu_custom_call.1} parent=1 // pred_check
      _
    $region91: #{tpu_custom_call.1} parent=1 // pred_check_branch
      %184 = sbr.rel (0) target = $region93
    $region92: #{tpu_custom_call.1} parent=1 // pred_region
      %186 = dma.done [#allocation3], 128
    $region93: #{tpu_custom_call.1} parent=1 // pred_fallthru
      _
    // Predicated region
    $region94: #{tpu_custom_call.1} parent=1 // pred_check
      _
    $region95: #{tpu_custom_call.1} parent=1 // pred_check_branch
      %188 = sbr.rel (0) target = $region97
    $region96: #{tpu_custom_call.1} parent=1 // pred_region
      %190 = dma.done [#allocation6], 16
    $region97: #{tpu_custom_call.1} parent=1 // pred_fallthru
      _
    // Predicated region
    $region98: #{tpu_custom_call.1} parent=1 // pred_check
      _
    $region99: #{tpu_custom_call.1} parent=1 // pred_check_branch
      %192 = sbr.rel (0) target = $region101
    $region100: #{tpu_custom_call.1} parent=1 // pred_region
      %194 = dma.done [#allocation6], 16
    $region101: #{tpu_custom_call.1} parent=1 // pred_fallthru
      _
    // Predicated region
    $region102: #{tpu_custom_call.1} parent=1 // pred_check
      _
    $region103: #{tpu_custom_call.1} parent=1 // pred_check_branch
      %196 = sbr.rel (0) target = $region105
    $region104: #{tpu_custom_call.1} parent=1 // pred_region
      %198 = dma.done [#allocation9], 256
    $region105: #{tpu_custom_call.1} parent=1 // pred_fallthru
      _
    // Predicated region
    $region106: #{tpu_custom_call.1} parent=1 // pred_check
      _
    $region107: #{tpu_custom_call.1} parent=1 // pred_check_branch
      %200 = sbr.rel (0) target = $region109
    $region108: #{tpu_custom_call.1} parent=1 // pred_region
      %202 = dma.done [#allocation9], 16
    $region109: #{tpu_custom_call.1} parent=1 // pred_fallthru
      _
    // Predicated region
    $region110: #{tpu_custom_call.1} parent=1 // pred_check
      _
    $region111: #{tpu_custom_call.1} parent=1 // pred_check_branch
      %204 = sbr.rel (0) target = $region113
    $region112: #{tpu_custom_call.1} parent=1 // pred_region
      %206 = dma.done [#allocation12], 512
    $region113: #{tpu_custom_call.1} parent=1 // pred_fallthru
      _
    // Predicated region
    $region114: #{tpu_custom_call.1} parent=1 // pred_check
      _
    $region115: #{tpu_custom_call.1} parent=1 // pred_check_branch
      %208 = sbr.rel (0) target = $region117
    $region116: #{tpu_custom_call.1} parent=1 // pred_region
      %210 = dma.done [#allocation12], 16
    $region117: #{tpu_custom_call.1} parent=1 // pred_fallthru
      _
    // Predicated region
    $region118: #{tpu_custom_call.1} parent=1 // pred_check
      _
    $region119: #{tpu_custom_call.1} parent=1 // pred_check_branch
      %212 = sbr.rel (0) target = $region121
    $region120: #{tpu_custom_call.1} parent=1 // pred_region
      %214 = dma.done [#allocation15], 32
    $region121: #{tpu_custom_call.1} parent=1 // pred_fallthru
      _
    // Predicated region
    $region122: #{tpu_custom_call.1} parent=1 // pred_check
      _
    $region123: #{tpu_custom_call.1} parent=1 // pred_check_branch
      %216 = sbr.rel (0) target = $region125
    $region124: #{tpu_custom_call.1} parent=1 // pred_region
      %218 = dma.done [#allocation15], 16
    $region125: #{tpu_custom_call.1} parent=1 // pred_fallthru
      _
    // Predicated region
    $region126: #{tpu_custom_call.1} parent=1 // pred_check
      _
    $region127: #{tpu_custom_call.1} parent=1 // pred_check_branch
      %220 = sbr.rel (0) target = $region129
    $region128: #{tpu_custom_call.1} parent=1 // pred_region
      %222 = dma.done [#allocation18], 512
    $region129: #{tpu_custom_call.1} parent=1 // pred_fallthru
      _
    // Predicated region
    $region130: #{tpu_custom_call.1} parent=1 // pred_check
      _
    $region131: #{tpu_custom_call.1} parent=1 // pred_check_branch
      %224 = sbr.rel (0) target = $region133
    $region132: #{tpu_custom_call.1} parent=1 // pred_region
      %226 = dma.done [#allocation18], 32
    $region133: #{tpu_custom_call.1} parent=1 // pred_fallthru
      _
    %v228 = vld [vmem:[%s0] sm:$0xf]
    %v229 = vld [vmem:[#allocation5] sm:$0x1]
    %v230 = vld [vmem:[#allocation7] sm:$0x1]
    %v232 = vperm.slane %v230, 0
    %vm234 = vcmask 15360
    %v236 = vsel %vm234, %v228, 0
    %vm238 = vcmask 1040384
    %v240 = vsel %vm238, %v229, 0
    %242 = vmatpush.bf16.msra.mxu0 0
    %243 = vmatpush.bf16.msra.mxu0 0
    %244 = vmatpush.bf16.msra.mxu0 0
    %245 = vmatpush.bf16.msra.mxu0 0
    %246 = vmatpush.bf16.msra.mxu0 0
    %247 = vmatpush.bf16.msra.mxu0 0
    %248 = vmatpush.bf16.msra.mxu0 0
    %249 = vmatpush.bf16.msra.mxu0 %v240
    %250 = vmatmul.bf16.gmra.mxu0 %v236
    %v251 = vpop.f32.mrf.mxu0
    %v252 = vadd.f32 %v232, %v251
    %v253 = vpop.f32.mrf.mxu0
    %254 = vdwg.mxu0
    %v255 = vmax.f32 %v252, 0.0
    %v256 = vpack.c.bf16 %v255, %v255
    %v257 = vld [vmem:[#allocation8] sm:$0xf]
    %v258 = vld [vmem:[#allocation8 + $0x4] sm:$0xf]
    %v259 = vld [vmem:[#allocation8 + $0x8] sm:$0xf]
    %v260 = vld [vmem:[#allocation8 + $0xc] sm:$0xf]
    %v261 = vld [vmem:[#allocation10] sm:$0x1]
    %v263 = vperm.slane %v261, 0
    %v269 = vunpack.c.l.b16 %v257
    %v270 = vunpack.c.l.b16 %v258
    %v271 = vunpack.c.l.b16 %v259
    %v272 = vunpack.c.l.b16 %v260
    %v273 = vpack.c.b16 %v270, %v269
    %v274 = vpack.c.b16 %v272, %v271
    %vm277 = vcmask 261120
    %v279 = vsel %vm277, %v256, 0
    %281 = vmatpush.bf16.msra.mxu0 0
    %282 = vmatpush.bf16.msra.mxu0 0
    %283 = vmatpush.bf16.msra.mxu0 0
    %284 = vmatpush.bf16.msra.mxu0 0
    %285 = vmatpush.bf16.msra.mxu0 0
    %286 = vmatpush.bf16.msra.mxu0 0
    %287 = vmatpush.bf16.msra.mxu0 %v274
    %288 = vmatpush.bf16.msra.mxu0 %v273
    %289 = vmatmul.bf16.gmra.mxu0 %v279
    %v290 = vpop.f32.mrf.mxu0
    %v291 = vadd.f32 %v263, %v290
    %v292 = vpop.f32.mrf.mxu0
    %293 = vdwg.mxu0
    %v294 = vmax.f32 %v291, 0.0
    %v295 = vpack.c.bf16 %v294, %v294
    %v296 = vld [vmem:[#allocation11] sm:$0xf]
    %v297 = vld [vmem:[#allocation11 + $0x4] sm:$0xf]
    %v298 = vld [vmem:[#allocation11 + $0x8] sm:$0xf]
    %v299 = vld [vmem:[#allocation11 + $0xc] sm:$0xf]
    %v300 = vld [vmem:[#allocation11 + $0x10] sm:$0xf]
    %v301 = vld [vmem:[#allocation11 + $0x14] sm:$0xf]
    %v302 = vld [vmem:[#allocation11 + $0x18] sm:$0xf]
    %v303 = vld [vmem:[#allocation11 + $0x1c] sm:$0xf]
    %v304 = vld [vmem:[#allocation13] sm:$0x1]
    %v306 = vperm.slane %v304, 0
    %v316 = vunpack.c.l.b16 %v296
    %v317 = vunpack.c.l.b16 %v297
    %v318 = vunpack.c.l.b16 %v298
    %v319 = vunpack.c.l.b16 %v299
    %v320 = vunpack.c.l.b16 %v300
    %v321 = vunpack.c.l.b16 %v301
    %v322 = vunpack.c.l.b16 %v302
    %v323 = vunpack.c.l.b16 %v303
    %v324 = vpack.c.b16 %v317, %v316
    %v325 = vpack.c.b16 %v319, %v318
    %v326 = vpack.c.b16 %v321, %v320
    %v327 = vpack.c.b16 %v323, %v322
    %vm332 = vcmask 523264
    %v334 = vsel %vm332, %v295, 0
    %336 = vmatpush.bf16.msra.mxu0 0
    %337 = vmatpush.bf16.msra.mxu0 0
    %338 = vmatpush.bf16.msra.mxu0 0
    %339 = vmatpush.bf16.msra.mxu0 0
    %340 = vmatpush.bf16.msra.mxu0 %v327
    %341 = vmatpush.bf16.msra.mxu0 %v326
    %342 = vmatpush.bf16.msra.mxu0 %v325
    %343 = vmatpush.bf16.msra.mxu0 %v324
    %344 = vmatmul.bf16.gmra.mxu0 %v334
    %v345 = vpop.f32.mrf.mxu0
    %v346 = vadd.f32 %v306, %v345
    %v347 = vpop.f32.mrf.mxu0
    %348 = vdwg.mxu0
    %v349 = vmax.f32 %v346, 0.0
    %v350 = vpack.c.bf16 %v349, %v349
    %v351 = vld [vmem:[%s8] sm:$0xff]
    %v352 = vld [vmem:[%s8 + $0x8] sm:$0xff]
    %v353 = vld [vmem:[%s8 + $0x10] sm:$0xff]
    %v354 = vld [vmem:[%s8 + $0x18] sm:$0xff]
    %v355 = vld [vmem:[%s8 + $0x20] sm:$0xff]
    %v356 = vld [vmem:[%s8 + $0x28] sm:$0xff]
    %v357 = vld [vmem:[%s8 + $0x30] sm:$0xff]
    %v358 = vld [vmem:[%s8 + $0x38] sm:$0xff]
    %v359 = vld [vmem:[%s8 + $0x40] sm:$0xff]
    %v360 = vld [vmem:[%s8 + $0x48] sm:$0xff]
    %v361 = vld [vmem:[%s8 + $0x50] sm:$0xff]
    %v362 = vld [vmem:[%s8 + $0x58] sm:$0xff]
    %v363 = vld [vmem:[%s8 + $0x60] sm:$0xff]
    %v364 = vld [vmem:[%s8 + $0x68] sm:$0xff]
    %v365 = vld [vmem:[%s8 + $0x70] sm:$0xff]
    %v366 = vld [vmem:[%s8 + $0x78] sm:$0xff]
    %v367 = vld [vmem:[#allocation14] sm:$0x3]
    %v369 = vperm.slane %v367, 0
    %v370 = vperm.slane %v367, 1
    %v389 = vunpack.c.l.b16 %v351
    %v390 = vunpack.c.h.b16 %v351
    %v391 = vunpack.c.l.b16 %v352
    %v392 = vunpack.c.h.b16 %v352
    %v393 = vunpack.c.l.b16 %v353
    %v394 = vunpack.c.h.b16 %v353
    %v395 = vunpack.c.l.b16 %v354
    %v396 = vunpack.c.h.b16 %v354
    %v397 = vunpack.c.l.b16 %v355
    %v398 = vunpack.c.h.b16 %v355
    %v399 = vunpack.c.l.b16 %v356
    %v400 = vunpack.c.h.b16 %v356
    %v401 = vunpack.c.l.b16 %v357
    %v402 = vunpack.c.h.b16 %v357
    %v403 = vunpack.c.l.b16 %v358
    %v404 = vunpack.c.h.b16 %v358
    %v405 = vunpack.c.l.b16 %v359
    %v406 = vunpack.c.h.b16 %v359
    %v407 = vunpack.c.l.b16 %v360
    %v408 = vunpack.c.h.b16 %v360
    %v409 = vunpack.c.l.b16 %v361
    %v410 = vunpack.c.h.b16 %v361
    %v411 = vunpack.c.l.b16 %v362
    %v412 = vunpack.c.h.b16 %v362
    %v413 = vunpack.c.l.b16 %v363
    %v414 = vunpack.c.h.b16 %v363
    %v415 = vunpack.c.l.b16 %v364
    %v416 = vunpack.c.h.b16 %v364
    %v417 = vunpack.c.l.b16 %v365
    %v418 = vunpack.c.h.b16 %v365
    %v419 = vunpack.c.l.b16 %v366
    %v420 = vunpack.c.h.b16 %v366
    %v421 = vpack.c.b16 %v391, %v389
    %v422 = vpack.c.b16 %v392, %v390
    %v423 = vpack.c.b16 %v395, %v393
    %v424 = vpack.c.b16 %v396, %v394
    %v425 = vpack.c.b16 %v399, %v397
    %v426 = vpack.c.b16 %v400, %v398
    %v427 = vpack.c.b16 %v403, %v401
    %v428 = vpack.c.b16 %v404, %v402
    %v429 = vpack.c.b16 %v407, %v405
    %v430 = vpack.c.b16 %v408, %v406
    %v431 = vpack.c.b16 %v411, %v409
    %v432 = vpack.c.b16 %v412, %v410
    %v433 = vpack.c.b16 %v415, %v413
    %v434 = vpack.c.b16 %v416, %v414
    %v435 = vpack.c.b16 %v419, %v417
    %v436 = vpack.c.b16 %v420, %v418
    %453 = vmatpush.bf16.msra.mxu0 %v435
    %454 = vmatpush.bf16.msra.mxu0 %v433
    %455 = vmatpush.bf16.msra.mxu0 %v431
    %456 = vmatpush.bf16.msra.mxu0 %v429
    %457 = vmatpush.bf16.msra.mxu0 %v427
    %458 = vmatpush.bf16.msra.mxu0 %v425
    %459 = vmatpush.bf16.msra.mxu0 %v423
    %460 = vmatpush.bf16.msra.mxu0 %v421
    %461 = vmatmul.bf16.gmra.mxu0 %v350
    %v462 = vpop.f32.mrf.mxu0
    %v463 = vadd.f32 %v369, %v462
    %v464 = vpop.f32.mrf.mxu0
    %465 = vdwg.mxu0
    %466 = vmatpush.bf16.msra.mxu0 %v436
    %467 = vmatpush.bf16.msra.mxu0 %v434
    %468 = vmatpush.bf16.msra.mxu0 %v432
    %469 = vmatpush.bf16.msra.mxu0 %v430
    %470 = vmatpush.bf16.msra.mxu0 %v428
    %471 = vmatpush.bf16.msra.mxu0 %v426
    %472 = vmatpush.bf16.msra.mxu0 %v424
    %473 = vmatpush.bf16.msra.mxu0 %v422
    %474 = vmatmul.bf16.gmra.mxu0 %v350
    %v475 = vpop.f32.mrf.mxu0
    %v476 = vadd.f32 %v370, %v475
    %v477 = vpop.f32.mrf.mxu0
    %478 = vdwg.mxu0
    %v479 = vmax.f32 %v463, 0.0
    %v480 = vmax.f32 %v476, 0.0
    %v481 = vpack.c.bf16 %v479, %v479
    %v482 = vpack.c.bf16 %v480, %v480
    %v483 = vld [vmem:[%s10] sm:$0xf]
    %v484 = vld [vmem:[%s10 + $0x4] sm:$0xf]
    %v485 = vld [vmem:[%s10 + $0x8] sm:$0xf]
    %v486 = vld [vmem:[%s10 + $0xc] sm:$0xf]
    %v487 = vld [vmem:[%s10 + $0x10] sm:$0xf]
    %v488 = vld [vmem:[%s10 + $0x14] sm:$0xf]
    %v489 = vld [vmem:[%s10 + $0x18] sm:$0xf]
    %v490 = vld [vmem:[%s10 + $0x1c] sm:$0xf]
    %v491 = vld [vmem:[%s10 + $0x20] sm:$0xf]
    %v492 = vld [vmem:[%s10 + $0x24] sm:$0xf]
    %v493 = vld [vmem:[%s10 + $0x28] sm:$0xf]
    %v494 = vld [vmem:[%s10 + $0x2c] sm:$0xf]
    %v495 = vld [vmem:[%s10 + $0x30] sm:$0xf]
    %v496 = vld [vmem:[%s10 + $0x34] sm:$0xf]
    %v497 = vld [vmem:[%s10 + $0x38] sm:$0xf]
    %v498 = vld [vmem:[%s10 + $0x3c] sm:$0xf]
    %v499 = vld [vmem:[%s10 + $0x40] sm:$0xf]
    %v500 = vld [vmem:[%s10 + $0x44] sm:$0xf]
    %v501 = vld [vmem:[%s10 + $0x48] sm:$0xf]
    %v502 = vld [vmem:[%s10 + $0x4c] sm:$0xf]
    %v503 = vld [vmem:[%s10 + $0x50] sm:$0xf]
    %v504 = vld [vmem:[%s10 + $0x54] sm:$0xf]
    %v505 = vld [vmem:[%s10 + $0x58] sm:$0xf]
    %v506 = vld [vmem:[%s10 + $0x5c] sm:$0xf]
    %v507 = vld [vmem:[%s10 + $0x60] sm:$0xf]
    %v508 = vld [vmem:[%s10 + $0x64] sm:$0xf]
    %v509 = vld [vmem:[%s10 + $0x68] sm:$0xf]
    %v510 = vld [vmem:[%s10 + $0x6c] sm:$0xf]
    %v511 = vld [vmem:[%s10 + $0x70] sm:$0xf]
    %v512 = vld [vmem:[%s10 + $0x74] sm:$0xf]
    %v513 = vld [vmem:[%s10 + $0x78] sm:$0xf]
    %v514 = vld [vmem:[%s10 + $0x7c] sm:$0xf]
    %v515 = vld [vmem:[#allocation16] sm:$0x1]
    %v517 = vperm.slane %v515, 0
    %v551 = vunpack.c.l.b16 %v483
    %v552 = vunpack.c.l.b16 %v484
    %v553 = vunpack.c.l.b16 %v485
    %v554 = vunpack.c.l.b16 %v486
    %v555 = vunpack.c.l.b16 %v487
    %v556 = vunpack.c.l.b16 %v488
    %v557 = vunpack.c.l.b16 %v489
    %v558 = vunpack.c.l.b16 %v490
    %v559 = vunpack.c.l.b16 %v491
    %v560 = vunpack.c.l.b16 %v492
    %v561 = vunpack.c.l.b16 %v493
    %v562 = vunpack.c.l.b16 %v494
    %v563 = vunpack.c.l.b16 %v495
    %v564 = vunpack.c.l.b16 %v496
    %v565 = vunpack.c.l.b16 %v497
    %v566 = vunpack.c.l.b16 %v498
    %v567 = vunpack.c.l.b16 %v499
    %v568 = vunpack.c.l.b16 %v500
    %v569 = vunpack.c.l.b16 %v501
    %v570 = vunpack.c.l.b16 %v502
    %v571 = vunpack.c.l.b16 %v503
    %v572 = vunpack.c.l.b16 %v504
    %v573 = vunpack.c.l.b16 %v505
    %v574 = vunpack.c.l.b16 %v506
    %v575 = vunpack.c.l.b16 %v507
    %v576 = vunpack.c.l.b16 %v508
    %v577 = vunpack.c.l.b16 %v509
    %v578 = vunpack.c.l.b16 %v510
    %v579 = vunpack.c.l.b16 %v511
    %v580 = vunpack.c.l.b16 %v512
    %v581 = vunpack.c.l.b16 %v513
    %v582 = vunpack.c.l.b16 %v514
    %v583 = vpack.c.b16 %v552, %v551
    %v584 = vpack.c.b16 %v554, %v553
    %v585 = vpack.c.b16 %v556, %v555
    %v586 = vpack.c.b16 %v558, %v557
    %v587 = vpack.c.b16 %v560, %v559
    %v588 = vpack.c.b16 %v562, %v561
    %v589 = vpack.c.b16 %v564, %v563
    %v590 = vpack.c.b16 %v566, %v565
    %v591 = vpack.c.b16 %v568, %v567
    %v592 = vpack.c.b16 %v570, %v569
    %v593 = vpack.c.b16 %v572, %v571
    %v594 = vpack.c.b16 %v574, %v573
    %v595 = vpack.c.b16 %v576, %v575
    %v596 = vpack.c.b16 %v578, %v577
    %v597 = vpack.c.b16 %v580, %v579
    %v598 = vpack.c.b16 %v582, %v581
    %615 = vmatpush.bf16.msra.mxu0 %v590
    %616 = vmatpush.bf16.msra.mxu0 %v589
    %617 = vmatpush.bf16.msra.mxu0 %v588
    %618 = vmatpush.bf16.msra.mxu0 %v587
    %619 = vmatpush.bf16.msra.mxu0 %v586
    %620 = vmatpush.bf16.msra.mxu0 %v585
    %621 = vmatpush.bf16.msra.mxu0 %v584
    %622 = vmatpush.bf16.msra.mxu0 %v583
    %623 = vmatmul.bf16.gmra.mxu0 %v481
    %v624 = vpop.f32.mrf.mxu0
    %v625 = vadd.f32 %v517, %v624
    %v626 = vpop.f32.mrf.mxu0
    %627 = vdwg.mxu0
    %628 = vmatpush.bf16.msra.mxu0 %v598
    %629 = vmatpush.bf16.msra.mxu0 %v597
    %630 = vmatpush.bf16.msra.mxu0 %v596
    %631 = vmatpush.bf16.msra.mxu0 %v595
    %632 = vmatpush.bf16.msra.mxu0 %v594
    %633 = vmatpush.bf16.msra.mxu0 %v593
    %634 = vmatpush.bf16.msra.mxu0 %v592
    %635 = vmatpush.bf16.msra.mxu0 %v591
    %636 = vmatmul.bf16.gmra.mxu0 %v482
    %v637 = vpop.f32.mrf.mxu0
    %v638 = vadd.f32 %v625, %v637
    %v639 = vpop.f32.mrf.mxu0
    %640 = vdwg.mxu0
    %v641 = vmul.f32 %v638, 0.5
    %v642 = vmul.f32 %v641, 1.442695
    %v643 = vpow.pop %v642
    %v644 = vld [vmem:[#allocation2] sm:$0xff]
    %646 = vrot.lane.b32.xlu0 %v644, 32
    %v647 = vpop.permute.xlu0 %646
    %v649 = vmul.f32 %v643, %v647
    %651 = vrot.lane.b32.xlu0 %v649, 96
    %v652 = vpop.permute.xlu0 %651
    %v654 = vadd.f32 %v638, %v652
    %v655 = vpack.c.bf16 %v654, %v654
    %v656 = vld [vmem:[#allocation17] sm:$0xff]
    %v657 = vld [vmem:[#allocation17 + $0x8] sm:$0xff]
    %v658 = vld [vmem:[#allocation17 + $0x10] sm:$0xff]
    %v659 = vld [vmem:[#allocation17 + $0x18] sm:$0xff]
    %v660 = vld [vmem:[#allocation19] sm:$0x3]
    %v662 = vperm.slane %v660, 0
    %v663 = vperm.slane %v660, 1
    %v670 = vunpack.c.l.b16 %v656
    %v671 = vunpack.c.h.b16 %v656
    %v672 = vunpack.c.l.b16 %v657
    %v673 = vunpack.c.h.b16 %v657
    %v674 = vunpack.c.l.b16 %v658
    %v675 = vunpack.c.h.b16 %v658
    %v676 = vunpack.c.l.b16 %v659
    %v677 = vunpack.c.h.b16 %v659
    %v678 = vpack.c.b16 %v672, %v670
    %v679 = vpack.c.b16 %v673, %v671
    %v680 = vpack.c.b16 %v676, %v674
    %v681 = vpack.c.b16 %v677, %v675
    %v687 = vsel %vm277, %v655, 0
    %689 = vmatpush.bf16.msra.mxu0 0
    %690 = vmatpush.bf16.msra.mxu0 0
    %691 = vmatpush.bf16.msra.mxu0 0
    %692 = vmatpush.bf16.msra.mxu0 0
    %693 = vmatpush.bf16.msra.mxu0 0
    %694 = vmatpush.bf16.msra.mxu0 0
    %695 = vmatpush.bf16.msra.mxu0 %v680
    %696 = vmatpush.bf16.msra.mxu0 %v678
    %697 = vmatmul.bf16.gmra.mxu0 %v687
    %v698 = vpop.f32.mrf.mxu0
    %v699 = vadd.f32 %v662, %v698
    %v700 = vpop.f32.mrf.mxu0
    %701 = vdwg.mxu0
    %702 = vmatpush.bf16.msra.mxu0 0
    %703 = vmatpush.bf16.msra.mxu0 0
    %704 = vmatpush.bf16.msra.mxu0 0
    %705 = vmatpush.bf16.msra.mxu0 0
    %706 = vmatpush.bf16.msra.mxu0 0
    %707 = vmatpush.bf16.msra.mxu0 0
    %708 = vmatpush.bf16.msra.mxu0 %v681
    %709 = vmatpush.bf16.msra.mxu0 %v679
    %710 = vmatmul.bf16.gmra.mxu0 %v687
    %v711 = vpop.f32.mrf.mxu0
    %v712 = vadd.f32 %v663, %v711
    %v713 = vpop.f32.mrf.mxu0
    %714 = vdwg.mxu0
    %v715 = vpack.c.bf16 %v699, %v699
    %v716 = vpack.c.bf16 %v712, %v712
    %v717 = vld [vmem:[%s14] sm:$0xf]
    %v718 = vld [vmem:[%s14 + $0x4] sm:$0xf]
    %v719 = vld [vmem:[%s14 + $0x8] sm:$0xf]
    %v720 = vld [vmem:[%s14 + $0xc] sm:$0xf]
    %v721 = vld [vmem:[%s14 + $0x10] sm:$0xf]
    %v722 = vld [vmem:[%s14 + $0x14] sm:$0xf]
    %v723 = vld [vmem:[%s14 + $0x18] sm:$0xf]
    %v724 = vld [vmem:[%s14 + $0x1c] sm:$0xf]
    %v725 = vld [vmem:[%s14 + $0x20] sm:$0xf]
    %v726 = vld [vmem:[%s14 + $0x24] sm:$0xf]
    %v727 = vld [vmem:[%s14 + $0x28] sm:$0xf]
    %v728 = vld [vmem:[%s14 + $0x2c] sm:$0xf]
    %v729 = vld [vmem:[%s14 + $0x30] sm:$0xf]
    %v730 = vld [vmem:[%s14 + $0x34] sm:$0xf]
    %v731 = vld [vmem:[%s14 + $0x38] sm:$0xf]
    %v732 = vld [vmem:[%s14 + $0x3c] sm:$0xf]
    %v733 = vld [vmem:[%s14 + $0x40] sm:$0xf]
    %v734 = vld [vmem:[%s14 + $0x44] sm:$0xf]
    %v735 = vld [vmem:[%s14 + $0x48] sm:$0xf]
    %v736 = vld [vmem:[%s14 + $0x4c] sm:$0xf]
    %v737 = vld [vmem:[%s14 + $0x50] sm:$0xf]
    %v738 = vld [vmem:[%s14 + $0x54] sm:$0xf]
    %v739 = vld [vmem:[%s14 + $0x58] sm:$0xf]
    %v740 = vld [vmem:[%s14 + $0x5c] sm:$0xf]
    %v741 = vld [vmem:[%s14 + $0x60] sm:$0xf]
    %v742 = vld [vmem:[%s14 + $0x64] sm:$0xf]
    %v743 = vld [vmem:[%s14 + $0x68] sm:$0xf]
    %v744 = vld [vmem:[%s14 + $0x6c] sm:$0xf]
    %v745 = vld [vmem:[%s14 + $0x70] sm:$0xf]
    %v746 = vld [vmem:[%s14 + $0x74] sm:$0xf]
    %v747 = vld [vmem:[%s14 + $0x78] sm:$0xf]
    %v748 = vld [vmem:[%s14 + $0x7c] sm:$0xf]
    %v749 = vld [vmem:[%s15] sm:$0x1]
    %v751 = vperm.slane %v749, 0
    %v785 = vunpack.c.l.b16 %v717
    %v786 = vunpack.c.l.b16 %v718
    %v787 = vunpack.c.l.b16 %v719
    %v788 = vunpack.c.l.b16 %v720
    %v789 = vunpack.c.l.b16 %v721
    %v790 = vunpack.c.l.b16 %v722
    %v791 = vunpack.c.l.b16 %v723
    %v792 = vunpack.c.l.b16 %v724
    %v793 = vunpack.c.l.b16 %v725
    %v794 = vunpack.c.l.b16 %v726
    %v795 = vunpack.c.l.b16 %v727
    %v796 = vunpack.c.l.b16 %v728
    %v797 = vunpack.c.l.b16 %v729
    %v798 = vunpack.c.l.b16 %v730
    %v799 = vunpack.c.l.b16 %v731
    %v800 = vunpack.c.l.b16 %v732
    %v801 = vunpack.c.l.b16 %v733
    %v802 = vunpack.c.l.b16 %v734
    %v803 = vunpack.c.l.b16 %v735
    %v804 = vunpack.c.l.b16 %v736
    %v805 = vunpack.c.l.b16 %v737
    %v806 = vunpack.c.l.b16 %v738
    %v807 = vunpack.c.l.b16 %v739
    %v808 = vunpack.c.l.b16 %v740
    %v809 = vunpack.c.l.b16 %v741
    %v810 = vunpack.c.l.b16 %v742
    %v811 = vunpack.c.l.b16 %v743
    %v812 = vunpack.c.l.b16 %v744
    %v813 = vunpack.c.l.b16 %v745
    %v814 = vunpack.c.l.b16 %v746
    %v815 = vunpack.c.l.b16 %v747
    %v816 = vunpack.c.l.b16 %v748
    %v817 = vpack.c.b16 %v786, %v785
    %v818 = vpack.c.b16 %v788, %v787
    %v819 = vpack.c.b16 %v790, %v789
    %v820 = vpack.c.b16 %v792, %v791
    %v821 = vpack.c.b16 %v794, %v793
    %v822 = vpack.c.b16 %v796, %v795
    %v823 = vpack.c.b16 %v798, %v797
    %v824 = vpack.c.b16 %v800, %v799
    %v825 = vpack.c.b16 %v802, %v801
    %v826 = vpack.c.b16 %v804, %v803
    %v827 = vpack.c.b16 %v806, %v805
    %v828 = vpack.c.b16 %v808, %v807
    %v829 = vpack.c.b16 %v810, %v809
    %v830 = vpack.c.b16 %v812, %v811
    %v831 = vpack.c.b16 %v814, %v813
    %v832 = vpack.c.b16 %v816, %v815
    %849 = vmatpush.bf16.msra.mxu0 %v824
    %850 = vmatpush.bf16.msra.mxu0 %v823
    %851 = vmatpush.bf16.msra.mxu0 %v822
    %852 = vmatpush.bf16.msra.mxu0 %v821
    %853 = vmatpush.bf16.msra.mxu0 %v820
    %854 = vmatpush.bf16.msra.mxu0 %v819
    %855 = vmatpush.bf16.msra.mxu0 %v818
    %856 = vmatpush.bf16.msra.mxu0 %v817
    %857 = vmatmul.bf16.gmra.mxu0 %v715
    %v858 = vpop.f32.mrf.mxu0
    %v859 = vadd.f32 %v751, %v858
    %v860 = vpop.f32.mrf.mxu0
    %861 = vdwg.mxu0
    %862 = vmatpush.bf16.msra.mxu0 %v832
    %863 = vmatpush.bf16.msra.mxu0 %v831
    %864 = vmatpush.bf16.msra.mxu0 %v830
    %865 = vmatpush.bf16.msra.mxu0 %v829
    %866 = vmatpush.bf16.msra.mxu0 %v828
    %867 = vmatpush.bf16.msra.mxu0 %v827
    %868 = vmatpush.bf16.msra.mxu0 %v826
    %869 = vmatpush.bf16.msra.mxu0 %v825
    %870 = vmatmul.bf16.gmra.mxu0 %v716
    %v871 = vpop.f32.mrf.mxu0
    %v872 = vadd.f32 %v859, %v871
    %v873 = vpop.f32.mrf.mxu0
    %874 = vdwg.mxu0
    %v875 = vmax.f32 %v872, 0.0
    %v876 = vpack.c.bf16 %v875, %v875
    %v877 = vld [vmem:[%s16] sm:$0xf]
    %v878 = vld [vmem:[%s16 + $0x4] sm:$0xf]
    %v879 = vld [vmem:[%s16 + $0x8] sm:$0xf]
    %v880 = vld [vmem:[%s16 + $0xc] sm:$0xf]
    %v881 = vld [vmem:[%s16 + $0x10] sm:$0xf]
    %v882 = vld [vmem:[%s16 + $0x14] sm:$0xf]
    %v883 = vld [vmem:[%s16 + $0x18] sm:$0xf]
    %v884 = vld [vmem:[%s16 + $0x1c] sm:$0xf]
    %v885 = vld [vmem:[%s16 + $0x20] sm:$0xf]
    %v886 = vld [vmem:[%s16 + $0x24] sm:$0xf]
    %v887 = vld [vmem:[%s16 + $0x28] sm:$0xf]
    %v888 = vld [vmem:[%s16 + $0x2c] sm:$0xf]
    %v889 = vld [vmem:[%s16 + $0x30] sm:$0xf]
    %v890 = vld [vmem:[%s16 + $0x34] sm:$0xf]
    %v891 = vld [vmem:[%s16 + $0x38] sm:$0xf]
    %v892 = vld [vmem:[%s16 + $0x3c] sm:$0xf]
    %v893 = vld [vmem:[%s17] sm:$0x1]
    %v895 = vperm.slane %v893, 0
    %v913 = vunpack.c.l.b16 %v877
    %v914 = vunpack.c.l.b16 %v878
    %v915 = vunpack.c.l.b16 %v879
    %v916 = vunpack.c.l.b16 %v880
    %v917 = vunpack.c.l.b16 %v881
    %v918 = vunpack.c.l.b16 %v882
    %v919 = vunpack.c.l.b16 %v883
    %v920 = vunpack.c.l.b16 %v884
    %v921 = vunpack.c.l.b16 %v885
    %v922 = vunpack.c.l.b16 %v886
    %v923 = vunpack.c.l.b16 %v887
    %v924 = vunpack.c.l.b16 %v888
    %v925 = vunpack.c.l.b16 %v889
    %v926 = vunpack.c.l.b16 %v890
    %v927 = vunpack.c.l.b16 %v891
    %v928 = vunpack.c.l.b16 %v892
    %v929 = vpack.c.b16 %v914, %v913
    %v930 = vpack.c.b16 %v916, %v915
    %v931 = vpack.c.b16 %v918, %v917
    %v932 = vpack.c.b16 %v920, %v919
    %v933 = vpack.c.b16 %v922, %v921
    %v934 = vpack.c.b16 %v924, %v923
    %v935 = vpack.c.b16 %v926, %v925
    %v936 = vpack.c.b16 %v928, %v927
    %945 = vmatpush.bf16.msra.mxu0 %v936
    %946 = vmatpush.bf16.msra.mxu0 %v935
    %947 = vmatpush.bf16.msra.mxu0 %v934
    %948 = vmatpush.bf16.msra.mxu0 %v933
    %949 = vmatpush.bf16.msra.mxu0 %v932
    %950 = vmatpush.bf16.msra.mxu0 %v931
    %951 = vmatpush.bf16.msra.mxu0 %v930
    %952 = vmatpush.bf16.msra.mxu0 %v929
    %953 = vmatmul.bf16.gmra.mxu0 %v876
    %v954 = vpop.f32.mrf.mxu0
    %v955 = vadd.f32 %v895, %v954
    %v956 = vpop.f32.mrf.mxu0
    %957 = vdwg.mxu0
    %v958 = vmax.f32 %v955, 0.0
    %v959 = vpack.c.bf16 %v958, %v958
    %v960 = vld [vmem:[%s18] sm:$0xf]
    %v961 = vld [vmem:[%s18 + $0x4] sm:$0xf]
    %v962 = vld [vmem:[%s18 + $0x8] sm:$0xf]
    %v963 = vld [vmem:[%s18 + $0xc] sm:$0xf]
    %v964 = vld [vmem:[%s18 + $0x10] sm:$0xf]
    %v965 = vld [vmem:[%s18 + $0x14] sm:$0xf]
    %v966 = vld [vmem:[%s18 + $0x18] sm:$0xf]
    %v967 = vld [vmem:[%s18 + $0x1c] sm:$0xf]
    %v968 = vld [vmem:[%s19] sm:$0x1]
    %v970 = vperm.slane %v968, 0
    %v980 = vunpack.c.l.b16 %v960
    %v981 = vunpack.c.l.b16 %v961
    %v982 = vunpack.c.l.b16 %v962
    %v983 = vunpack.c.l.b16 %v963
    %v984 = vunpack.c.l.b16 %v964
    %v985 = vunpack.c.l.b16 %v965
    %v986 = vunpack.c.l.b16 %v966
    %v987 = vunpack.c.l.b16 %v967
    %v988 = vpack.c.b16 %v981, %v980
    %v989 = vpack.c.b16 %v983, %v982
    %v990 = vpack.c.b16 %v985, %v984
    %v991 = vpack.c.b16 %v987, %v986
    %v997 = vsel %vm332, %v959, 0
    %999 = vmatpush.bf16.msra.mxu0 0
    %1000 = vmatpush.bf16.msra.mxu0 0
    %1001 = vmatpush.bf16.msra.mxu0 0
    %1002 = vmatpush.bf16.msra.mxu0 0
    %1003 = vmatpush.bf16.msra.mxu0 %v991
    %1004 = vmatpush.bf16.msra.mxu0 %v990
    %1005 = vmatpush.bf16.msra.mxu0 %v989
    %1006 = vmatpush.bf16.msra.mxu0 %v988
    %1007 = vmatmul.bf16.gmra.mxu0 %v997
    %v1008 = vpop.f32.mrf.mxu0
    %v1009 = vadd.f32 %v970, %v1008
    %v1010 = vpop.f32.mrf.mxu0
    %1011 = vdwg.mxu0
    %v1012 = vmax.f32 %v1009, 0.0
    %v1013 = vpack.c.bf16 %v1012, %v1012
    %v1014 = vld [vmem:[%s20] sm:$0xf]
    %v1015 = vld [vmem:[%s20 + $0x4] sm:$0xf]
    %v1016 = vld [vmem:[%s20 + $0x8] sm:$0xf]
    %v1017 = vld [vmem:[%s20 + $0xc] sm:$0xf]
    %v1018 = vld [vmem:[%s21] sm:$0x1]
    %v1020 = vperm.slane %v1018, 0
    %v1026 = vunpack.c.l.b16 %v1014
    %v1027 = vunpack.c.l.b16 %v1015
    %v1028 = vunpack.c.l.b16 %v1016
    %v1029 = vunpack.c.l.b16 %v1017
    %v1030 = vpack.c.b16 %v1027, %v1026
    %v1031 = vpack.c.b16 %v1029, %v1028
    %v1035 = vsel %vm277, %v1013, 0
    %1037 = vmatpush.bf16.msra.mxu0 0
    %1038 = vmatpush.bf16.msra.mxu0 0
    %1039 = vmatpush.bf16.msra.mxu0 0
    %1040 = vmatpush.bf16.msra.mxu0 0
    %1041 = vmatpush.bf16.msra.mxu0 0
    %1042 = vmatpush.bf16.msra.mxu0 0
    %1043 = vmatpush.bf16.msra.mxu0 %v1031
    %1044 = vmatpush.bf16.msra.mxu0 %v1030
    %1045 = vmatmul.bf16.gmra.mxu0 %v1035
    %v1046 = vpop.f32.mrf.mxu0
    %v1047 = vadd.f32 %v1020, %v1046
    %v1048 = vpop.f32.mrf.mxu0
    %1049 = vdwg.mxu0
    %v1050 = vsub.f32 0.0, %v1047
    %v1051 = vmul.f32 %v1050, 1.442695
    %v1052 = vpow.pop %v1051
    %v1053 = vadd.f32 %v1052, 1.0
    %v1054 = vrcp.pop %v1053
    %1055 = vst.msk [vmem:[#allocation20] sm:$0xff] %vm332, %v638
    %1057 = vrot.lane.b32.xlu0 %v1054, 64
    %v1058 = vpop.permute.xlu0 %1057
    %vm1060 = vcmask 540160
    %1061 = vst.msk [vmem:[#allocation20] sm:$0xff] %vm1060, %v1058
    %vm1062 = vcmask 1048080
    %1063 = vst.msk [vmem:[#allocation20] sm:$0xff] %vm1062, 0.0
    // Predicated region
    $region134: #{tpu_custom_call.1} parent=1 // pred_check
      _
    $region135: #{tpu_custom_call.1} parent=1 // pred_check_branch
      %1065 = sbr.rel (0) target = $region137
    $region136: #{tpu_custom_call.1} parent=1 // pred_region
      %1067 = vsyncadd [#allocation4], 0
      %s1069 = sshll.u32 [#allocation20], 4
      %s1070 = int_to_ptr.vmem [resolvable:$true] %s1069
      %s1071 = sshll.u32 %s22, 4
      %s1072 = int_to_ptr.hbm [resolvable:$true] %s1071
      %1074 = dma.vmem_to_hbm [thread:$0]  %s1070, 128, %s1072, [#allocation4]
    $region137: #{tpu_custom_call.1} parent=1 // pred_fallthru
      _
    // Predicated region
    $region138: #{tpu_custom_call.1} parent=1 // pred_check
      _
    $region139: #{tpu_custom_call.1} parent=1 // pred_check_branch
      %1076 = sbr.rel (0) target = $region141
    $region140: #{tpu_custom_call.1} parent=1 // pred_region
      %1078 = dma.done [#allocation4], 128
    $region141: #{tpu_custom_call.1} parent=1 // pred_fallthru
      _
    %1079 = vsyncpa [#allocation3], 1
    %1080 = vsyncpa [#allocation6], 1
    %1081 = vsyncpa [#allocation9], 1
    %1082 = vsyncpa [#allocation12], 1
    %1083 = vsyncpa [#allocation15], 1
    %1084 = vsyncpa [#allocation18], 1
    %1085 = vsyncpa [#allocation4], 1

</llo_original>
